<compile_context>
chip_gen: v5e
topology: v5e:2x2
jax: 0.10.0
libtpu: 0.0.40
codegen_flags: <defaults>
</compile_context>

<pallas_src>
import functools

import jax
import jax.numpy as jnp
from jax.experimental import pallas as pl
from jax.experimental.pallas import tpu as pltpu


PERCEPT_H = 256          # hidden width of the perception MLP
WCRIT_H = 50             # worker critic hidden width


# ----------------------------------------------------------------------------- helpers
def _r128(x):
    return ((x + 127) // 128) * 128


def _sigmoid(x):
    return 1.0 / (1.0 + jnp.exp(-x))


def _l2_normalize(x, eps=1e-12):
    # matches torch.nn.functional.normalize(p=2, dim=-1, eps=1e-12)
    ss = jnp.sum(x * x, axis=-1, keepdims=True)
    return x * jax.lax.rsqrt(jnp.maximum(ss, eps * eps))


def make_layout(FP, d, na):
    """Static, 128-aligned column offsets for the packed weight / bias slabs."""
    H = d * na
    # columns inside the fused big matmul (M3) output
    o_sp = 4 * H                      # [state_m|state_s] pre-activation, width 2d
    o_mr = _r128(o_sp + 2 * d)        # manager recurrent gates, width 4d
    o_sr = o_mr + _r128(4 * d)        # supervisor recurrent gates, width 4d
    o_we = o_sr + _r128(4 * d)        # w_exp = phi(gsum) expanded over actions, width H
    w3w = o_we + _r128(H)
    # bf16 weight slab columns
    cW1 = 0
    cW2 = _r128(PERCEPT_H)
    cW3 = cW2 + _r128(d)
    cW4 = cW3 + w3w
    cW5 = cW4 + _r128(8 * d)
    w5w = _r128(d + WCRIT_H)
    wcols = cW5 + w5w
    wrows = max(FP, PERCEPT_H, 4 * d + H, d + H)
    wrows = ((wrows + 15) // 16) * 16
    # f32 bias / critic-row slab columns
    pb1 = 0
    pb2 = _r128(PERCEPT_H)
    pbsp = pb2 + _r128(d)
    pbm = pbsp + _r128(2 * d)
    pbs = pbm + _r128(4 * d)
    pbw = pbs + _r128(4 * d)
    pbc1 = pbw + _r128(4 * H)
    pwcm = pbc1 + _r128(WCRIT_H)
    pwcs = pwcm + _r128(d)
    pwc2 = pwcs + _r128(d)
    psc = pwc2 + _r128(WCRIT_H)
    pcols = psc + 128
    return dict(o_sp=o_sp, o_mr=o_mr, o_sr=o_sr, o_we=o_we, w3w=w3w,
                cW1=cW1, cW2=cW2, cW3=cW3, cW4=cW4, cW5=cW5, w5w=w5w,
                wrows=wrows, wcols=wcols,
                pb1=pb1, pb2=pb2, pbsp=pbsp, pbm=pbm, pbs=pbs, pbw=pbw,
                pbc1=pbc1, pwcm=pwcm, pwcs=pwcs, pwc2=pwc2, psc=psc, pcols=pcols)


# ----------------------------------------------------------------------------- fused kernel
def mpnets_fused_kernel(dils_ref, x_ref, mask_ref, hm_ref, hs_ref, hw_ref, *rest,
                        lay, d, na, r_m, r_s, n_goals):
    f32 = jnp.float32
    bf16 = jnp.bfloat16
    B = x_ref.shape[0]
    H = d * na
    PH = PERCEPT_H

    goal_refs = rest[:n_goals]
    w_ref = rest[n_goals]                 # bf16 weight slab
    p_ref = rest[n_goals + 1]             # f32 bias / critic-row slab
    main_ref, hm_out_ref, hs_out_ref, hw_out_ref = rest[n_goals + 2:]

    def mm(x, w):
        return jnp.dot(x.astype(bf16), w, preferred_element_type=f32)

    def pvec(off, width):                 # (1, width) f32, broadcasts over batch
        return p_ref[0:1, off:off + width]

    dil_m = dils_ref[0]
    dil_s = dils_ref[1]
    mask = mask_ref[...]

    # worker's sum over goals_s[:c_s+1], computed in-kernel (a few VPU adds)
    gsum = goal_refs[0][...]
    for g_ref in goal_refs[1:]:
        gsum = gsum + g_ref[...]

    # masked recurrent state (torch: hidden = (mask*h, mask*c))
    rdm, rds = r_m * d, r_s * d
    hm = hm_ref[...]
    hs = hs_ref[...]
    hw = hw_ref[...]
    hxm, cxm = hm[:, :rdm] * mask, hm[:, rdm:] * mask
    hxs, cxs = hs[:, :rds] * mask, hs[:, rds:] * mask
    hwx, hwc = hw[:, :H] * mask, hw[:, H:] * mask

    # dilated-LSTM active-slot compression: runtime dil -> lane mask -> (B, d) slot.
    # (only the active slot is nonzero after the mask, so summing slot blocks == select)
    def slot_compress(hx, cx, dil, r):
        lanes = jax.lax.broadcasted_iota(jnp.int32, hx.shape, 1)
        lo = dil * d
        sel = (lanes >= lo) & (lanes < lo + d)
        hx_a = jnp.where(sel, hx, 0.0)
        cx_a = jnp.where(sel, cx, 0.0)
        h_slot, c_slot = hx_a[:, :d], cx_a[:, :d]
        for s in range(1, r):
            h_slot = h_slot + hx_a[:, s * d:(s + 1) * d]
            c_slot = c_slot + cx_a[:, s * d:(s + 1) * d]
        return sel, h_slot, c_slot

    sel_m, hslot_m, cslot_m = slot_compress(hxm, cxm, dil_m, r_m)
    sel_s, hslot_s, cslot_s = slot_compress(hxs, cxs, dil_s, r_s)

    # ---- perception: Linear(F,256) -> ReLU -> Linear(256,d) -> ReLU --------------------
    FP = x_ref.shape[1]
    h1 = jnp.maximum(mm(x_ref[...], w_ref[0:FP, lay["cW1"]:lay["cW1"] + PH])
                     + pvec(lay["pb1"], PH), 0.0)
    z = jnp.maximum(mm(h1, w_ref[0:PH, lay["cW2"]:lay["cW2"] + d])
                    + pvec(lay["pb2"], d), 0.0)                              # (B, d)

    # ---- M3: one fused MXU pass for everything whose LHS is known up-front -------------
    lhs3 = jnp.concatenate([z, hwx, hslot_m, hslot_s, gsum], axis=1)         # (B, 4d+H)
    K3 = 4 * d + H
    out3 = mm(lhs3, w_ref[0:K3, lay["cW3"]:lay["cW3"] + lay["w3w"]])

    wgates = out3[:, 0:4 * H] + pvec(lay["pbw"], 4 * H)                      # worker gates
    states = jnp.maximum(out3[:, lay["o_sp"]:lay["o_sp"] + 2 * d]
                         + pvec(lay["pbsp"], 2 * d), 0.0)                    # [state_m|state_s]
    state_m, state_s = states[:, 0:d], states[:, d:2 * d]
    mgr_rec = out3[:, lay["o_mr"]:lay["o_mr"] + 4 * d]
    sup_rec = out3[:, lay["o_sr"]:lay["o_sr"] + 4 * d]
    w_exp = out3[:, lay["o_we"]:lay["o_we"] + H]                             # phi(gsum) expanded

    # ---- worker LSTMCell (H = d*na, gate slices tile-aligned) ---------------------------
    wi = _sigmoid(wgates[:, 0:H])
    wf = _sigmoid(wgates[:, H:2 * H])
    wgn = jnp.tanh(wgates[:, 2 * H:3 * H])
    wo = _sigmoid(wgates[:, 3 * H:4 * H])
    cw_new = wf * hwc + wi * wgn
    u = wo * jnp.tanh(cw_new)                                                # (B, H)

    # ---- M4: block-diagonal input gates for manager + supervisor dilated LSTMs ---------
    gates_in = mm(states, w_ref[0:2 * d, lay["cW4"]:lay["cW4"] + 8 * d])     # (B, 8d)
    gates_m = gates_in[:, 0:4 * d] + mgr_rec + pvec(lay["pbm"], 4 * d)
    gates_s = gates_in[:, 4 * d:8 * d] + sup_rec + pvec(lay["pbs"], 4 * d)

    def dlstm_step(gates, c_slot, hx, cx, sel, r):
        i = _sigmoid(gates[:, 0:d])
        f = _sigmoid(gates[:, d:2 * d])
        g = jnp.tanh(gates[:, 2 * d:3 * d])
        o = _sigmoid(gates[:, 3 * d:4 * d])
        c_new = f * c_slot + i * g
        h_new = o * jnp.tanh(c_new)
        hx_new = jnp.where(sel, jnp.concatenate([h_new] * r, axis=1), hx)
        cx_new = jnp.where(sel, jnp.concatenate([c_new] * r, axis=1), cx)
        y = hx_new[:, 0:d]                        # mean over the r slots
        for s in range(1, r):
            y = y + hx_new[:, s * d:(s + 1) * d]
        return y * (1.0 / r), hx_new, cx_new

    goal_hat_m, hxm_new, cxm_new = dlstm_step(gates_m, cslot_m, hxm, cxm, sel_m, r_m)
    y_s, hxs_new, cxs_new = dlstm_step(gates_s, cslot_s, hxs, cxs, sel_s, r_s)

    # manager critic head on the VPU/XLU (exact f32)
    value_m = (jnp.sum(goal_hat_m * pvec(lay["pwcm"], d), axis=-1, keepdims=True)
               + p_ref[0:1, lay["psc"]:lay["psc"] + 1])
    goal_m = _l2_normalize(goal_hat_m)

    # ---- M5: phi_s(goal_m) and worker-critic hidden in one small MXU pass --------------
    lhs5 = jnp.concatenate([goal_m, u], axis=1)                              # (B, d+H)
    out5 = mm(lhs5, w_ref[0:d + H, lay["cW5"]:lay["cW5"] + lay["w5w"]])
    phi_goal_m = out5[:, 0:d]
    h1w = jnp.maximum(out5[:, d:d + WCRIT_H] + pvec(lay["pbc1"], WCRIT_H), 0.0)

    # supervisor head
    goal_hat_s = phi_goal_m + y_s
    value_s = (jnp.sum(goal_hat_s * pvec(lay["pwcs"], d), axis=-1, keepdims=True)
               + p_ref[0:1, lay["psc"] + 1:lay["psc"] + 2])
    goal_s = _l2_normalize(goal_hat_s)

    # worker critic head (exact f32 reduce)
    value_w = (jnp.sum(h1w * pvec(lay["pwc2"], WCRIT_H), axis=-1, keepdims=True)
               + p_ref[0:1, lay["psc"] + 2:lay["psc"] + 3])

    # policy: a = softmax_a( sum_k w[b,k] * u[b, k*na + a] ) -- exact, XLU lane reduces
    prod = w_exp * u                                                         # (B, H)
    lane_mod = jax.lax.broadcasted_iota(jnp.int32, prod.shape, 1) % na
    logit_cols = [jnp.sum(jnp.where(lane_mod == a_i, prod, 0.0), axis=-1, keepdims=True)
                  for a_i in range(na)]
    logits = jnp.concatenate(logit_cols, axis=1)                             # (B, na)
    mx = jnp.max(logits, axis=-1, keepdims=True)
    e = jnp.exp(logits - mx)
    a_dist = e / jnp.sum(e, axis=-1, keepdims=True)                          # exact normalize

    # ---- outputs: lane-grouped stores ---------------------------------------------------
    main_ref[...] = jnp.zeros((B, main_ref.shape[1]), f32)
    main_ref[:, 0:4 * d] = jnp.concatenate([goal_m, state_m, goal_s, state_s], axis=1)
    main_ref[:, 4 * d:4 * d + na + 3] = jnp.concatenate(
        [a_dist, value_m, value_s, value_w], axis=1)
    hm_out_ref[:, 0:rdm] = hxm_new
    hm_out_ref[:, rdm:] = cxm_new
    hs_out_ref[...] = jnp.concatenate([hxs_new, cxs_new], axis=1)
    hw_out_ref[:, 0:H] = u
    hw_out_ref[:, H:] = cw_new


# ----------------------------------------------------------------------------- pallas wrapper
def _fused_forward_impl(wslab, pslab, dils, xf, mask, hid_m, hid_s, hid_w, *goals_hist):
    B = xf.shape[0]
    d = goals_hist[0].shape[1]
    H = hid_w.shape[1] // 2
    na = H // d
    r_m = hid_m.shape[1] // (2 * d)
    r_s = hid_s.shape[1] // (2 * d)
    FP = xf.shape[1]
    n_goals = len(goals_hist)
    lay = make_layout(FP, d, na)
    main_w = _r128(4 * d + na + 3)

    inputs = (dils, xf, mask, hid_m, hid_s, hid_w, *goals_hist, wslab, pslab)
    in_specs = ([pl.BlockSpec(memory_space=pltpu.MemorySpace.SMEM)]          # runtime dilations
                + [pl.BlockSpec(memory_space=pltpu.MemorySpace.VMEM)] * (len(inputs) - 1))
    out_shape = (jax.ShapeDtypeStruct((B, main_w), jnp.float32),             # packed outputs
                 jax.ShapeDtypeStruct(hid_m.shape, jnp.float32),             # manager  [hx|cx]
                 jax.ShapeDtypeStruct(hid_s.shape, jnp.float32),             # superv.  [hx|cx]
                 jax.ShapeDtypeStruct(hid_w.shape, jnp.float32))             # worker   [u |cx]
    out_specs = tuple(pl.BlockSpec(memory_space=pltpu.MemorySpace.VMEM) for _ in out_shape)

    kern = functools.partial(mpnets_fused_kernel, lay=lay, d=d, na=na,
                             r_m=r_m, r_s=r_s, n_goals=n_goals)
    main, hm_new, hs_new, hw_new = pl.pallas_call(
        kern,
        in_specs=in_specs,
        out_specs=out_specs,
        out_shape=out_shape,
        # recurrent state updated in place: hid_m / hid_s / hid_w -> outputs 1 / 2 / 3
        input_output_aliases={3: 1, 4: 2, 5: 3},
    )(*inputs)

    goal_m = main[:, 0:d]
    state_m = main[:, d:2 * d]
    goal_s = main[:, 2 * d:3 * d]
    state_s = main[:, 3 * d:4 * d]
    a_dist = main[:, 4 * d:4 * d + na]
    value_m = main[:, 4 * d + na:4 * d + na + 1]
    value_s = main[:, 4 * d + na + 1:4 * d + na + 2]
    value_w = main[:, 4 * d + na + 2:4 * d + na + 3]
    return (a_dist, goal_m, state_m, goal_s, state_s,
            value_m, value_s, value_w, hm_new, hs_new, hw_new)


_fused_call = jax.jit(_fused_forward_impl)


# ----------------------------------------------------------------------------- MPnets forward (glue)
def mpnets_forward(kparams, x, goals_m, states_m, goals_s, states_s, mask,
                   hidden_m, hidden_s, hidden_w, dils, *, c_m, c_s, d, na):
    B = x.shape[0]
    xf = x.reshape(B, -1).astype(jnp.float32)
    FP = kparams["FP"]
    if xf.shape[1] < FP:
        xf = jnp.pad(xf, ((0, 0), (0, FP - xf.shape[1])))

    # list maintenance, same order as the PyTorch forward (pop-if-long, then append)
    if len(goals_m) > 2 * c_m + 1:
        goals_m.pop(0)
        states_m.pop(0)
    if len(goals_s) > 2 * c_s + 1:
        goals_s.pop(0)
        states_s.pop(0)

    # torch slices goals_s[:c_s+1] *after* appending this step's goal_s, but since
    # len(goals_s) >= c_s+1 already, that slice never contains the new goal, so the
    # whole step runs as ONE fused kernel with the history passed in directly.
    assert len(goals_s) >= c_s + 1
    goal_hist = tuple(goals_s[:c_s + 1])

    (action_dist, goal_m, state_m, goal_s, state_s, value_m, value_s, value_w,
     hm_new, hs_new, hw_new) = _fused_call(
        kparams["W"], kparams["P"], dils, xf, mask,
        hidden_m, hidden_s, hidden_w, *goal_hist)

    # TODO(synk): eps-greedy random goal replacement (`eps > torch.rand(1)`) skipped (eps = 0).
    goals_m.append(goal_m)
    states_m.append(jax.lax.stop_gradient(state_m))
    goals_s.append(goal_s)
    states_s.append(jax.lax.stop_gradient(state_s))

    new_hidden = {"m": hm_new, "s": hs_new, "w": hw_new}
    return (action_dist, goals_m, states_m, value_m,
            goals_s, states_s, value_s, value_w, new_hidden)


# ----------------------------------------------------------------------------- parameters
def init_params(key, F, d, na):
    """Natural (PyTorch-equivalent) parameters; Linear weights stored as (in, out)."""
    H = d * na
    ks = iter(jax.random.split(key, 40))

    def w(shape):
        return jax.random.normal(next(ks), shape, jnp.float32) * 0.1

    return {
        "percept": {"W1": w((F, PERCEPT_H)), "b1": w((1, PERCEPT_H)),
                    "W2": w((PERCEPT_H, d)), "b2": w((1, d))},
        "manager": {"Wspace": w((d, d)), "bspace": w((1, d)),
                    "Wih": w((d, 4 * d)), "Whh": w((d, 4 * d)), "blstm": w((1, 4 * d)),
                    "Wc": w((d, 1)), "bc": w((1, 1))},
        "supervisor": {"Wspace": w((d, d)), "bspace": w((1, d)), "Wphi": w((d, d)),
                       "Wih": w((d, 4 * d)), "Whh": w((d, 4 * d)), "blstm": w((1, 4 * d)),
                       "Wc": w((d, 1)), "bc": w((1, 1))},
        "worker": {"Wih": w((d, 4 * H)), "Whh": w((H, 4 * H)), "blstm": w((1, 4 * H)),
                   "Wphi": w((d, d)),
                   "Wc1": w((H, WCRIT_H)), "bc1": w((1, WCRIT_H)),
                   "Wc2": w((WCRIT_H, 1)), "bc2": w((1, 1))},
    }


def prepare_kernel_params(p, *, d, na, F):
    """Pack all weights into one bf16 MXU slab + one f32 bias/critic-row slab."""
    H = d * na
    PH = PERCEPT_H
    FP = ((F + 15) // 16) * 16                       # bf16 sublane multiple for W1 rows
    lay = make_layout(FP, d, na)

    W = jnp.zeros((lay["wrows"], lay["wcols"]), jnp.float32)
    # perception
    W = W.at[0:F, lay["cW1"]:lay["cW1"] + PH].set(p["percept"]["W1"])
    W = W.at[0:PH, lay["cW2"]:lay["cW2"] + d].set(p["percept"]["W2"])
    # M3 (LHS rows: z | hwx | h_slot_m | h_slot_s | gsum)
    c3 = lay["cW3"]
    rz, rhw, rhm, rhs_, rg = 0, d, d + H, 2 * d + H, 3 * d + H
    W = W.at[rz:rz + d, c3:c3 + 4 * H].set(p["worker"]["Wih"])
    W = W.at[rhw:rhw + H, c3:c3 + 4 * H].set(p["worker"]["Whh"])
    W = W.at[rz:rz + d, c3 + lay["o_sp"]:c3 + lay["o_sp"] + d].set(p["manager"]["Wspace"])
    W = W.at[rz:rz + d, c3 + lay["o_sp"] + d:c3 + lay["o_sp"] + 2 * d].set(
        p["supervisor"]["Wspace"])
    W = W.at[rhm:rhm + d, c3 + lay["o_mr"]:c3 + lay["o_mr"] + 4 * d].set(p["manager"]["Whh"])
    W = W.at[rhs_:rhs_ + d, c3 + lay["o_sr"]:c3 + lay["o_sr"] + 4 * d].set(
        p["supervisor"]["Whh"])
    # WphiE = Wphi_w @ E with E[k, k*na+a] = 1 (fold worker phi into the action expand)
    E = (jnp.arange(d)[:, None] == (jnp.arange(H)[None, :] // na)).astype(jnp.float32)
    W = W.at[rg:rg + d, c3 + lay["o_we"]:c3 + lay["o_we"] + H].set(p["worker"]["Wphi"] @ E)
    # M4: block-diagonal input-gate weights for manager / supervisor dilated LSTMs
    c4 = lay["cW4"]
    W = W.at[0:d, c4:c4 + 4 * d].set(p["manager"]["Wih"])
    W = W.at[d:2 * d, c4 + 4 * d:c4 + 8 * d].set(p["supervisor"]["Wih"])
    # M5: phi_s (from goal_m rows) | Wc1 (from u rows)
    c5 = lay["cW5"]
    W = W.at[0:d, c5:c5 + d].set(p["supervisor"]["Wphi"])
    W = W.at[d:d + H, c5 + d:c5 + d + WCRIT_H].set(p["worker"]["Wc1"])

    P = jnp.zeros((1, lay["pcols"]), jnp.float32)
    P = P.at[:, lay["pb1"]:lay["pb1"] + PH].set(p["percept"]["b1"])
    P = P.at[:, lay["pb2"]:lay["pb2"] + d].set(p["percept"]["b2"])
    P = P.at[:, lay["pbsp"]:lay["pbsp"] + d].set(p["manager"]["bspace"])
    P = P.at[:, lay["pbsp"] + d:lay["pbsp"] + 2 * d].set(p["supervisor"]["bspace"])
    P = P.at[:, lay["pbm"]:lay["pbm"] + 4 * d].set(p["manager"]["blstm"])
    P = P.at[:, lay["pbs"]:lay["pbs"] + 4 * d].set(p["supervisor"]["blstm"])
    P = P.at[:, lay["pbw"]:lay["pbw"] + 4 * H].set(p["worker"]["blstm"])
    P = P.at[:, lay["pbc1"]:lay["pbc1"] + WCRIT_H].set(p["worker"]["bc1"])
    P = P.at[:, lay["pwcm"]:lay["pwcm"] + d].set(p["manager"]["Wc"].T)
    P = P.at[:, lay["pwcs"]:lay["pwcs"] + d].set(p["supervisor"]["Wc"].T)
    P = P.at[:, lay["pwc2"]:lay["pwc2"] + WCRIT_H].set(p["worker"]["Wc2"].T)
    P = P.at[:, lay["psc"]:lay["psc"] + 1].set(p["manager"]["bc"])
    P = P.at[:, lay["psc"] + 1:lay["psc"] + 2].set(p["supervisor"]["bc"])
    P = P.at[:, lay["psc"] + 2:lay["psc"] + 3].set(p["worker"]["bc2"])

    return {"W": W.astype(jnp.bfloat16), "P": P, "FP": FP}


# ----------------------------------------------------------------------------- main
if __name__ == "__main__":
    # small config consistent with MPnets(__init__); B = 8 fills the fp32 sublane tile
    B = 8                       # num_workers
    d = 32                      # hidden_dim_manager
    na = 4                      # n_actions   (worker hidden H = d*na = 128)
    c_m, c_s = 3, 2             # time horizons
    r_m, r_s = 4, 2             # dilations
    input_dim = (1, 4, 4, 3)    # (stack, H, W, C) for the mlp preprocessor
    F = input_dim[-1] * input_dim[1] * input_dim[2]   # 48

    key = jax.random.PRNGKey(0)
    k_par, k_x, k_gm, k_sm, k_gs, k_ss = jax.random.split(key, 6)
    params = init_params(k_par, F, d, na)
    kparams = prepare_kernel_params(params, d=d, na=na, F=F)

    x = jax.random.normal(k_x, (B, input_dim[1], input_dim[2], input_dim[3]), jnp.float32)
    mask = jnp.ones((B, 1), jnp.float32)

    def make_list(k, n):
        return [a for a in jax.random.normal(k, (n, B, d), jnp.float32) * 0.1]

    goals_m = make_list(k_gm, 2 * c_m + 1)
    states_m = make_list(k_sm, 2 * c_m + 1)
    goals_s = make_list(k_gs, 2 * c_s + 1)
    states_s = make_list(k_ss, 2 * c_s + 1)

    # init_hidden -> zeros; lane-major [hx | cx] per module (slot-contiguous dilation slots)
    hidden_m = jnp.zeros((B, 2 * r_m * d), jnp.float32)
    hidden_s = jnp.zeros((B, 2 * r_s * d), jnp.float32)
    hidden_w = jnp.zeros((B, 2 * d * na), jnp.float32)
    dils = jnp.array([2, 1], jnp.int32)   # runtime dilation counters (manager, supervisor)

    out = mpnets_forward(kparams, x, goals_m, states_m, goals_s, states_s, mask,
                         hidden_m, hidden_s, hidden_w, dils,
                         c_m=c_m, c_s=c_s, d=d, na=na)

    (action_dist, goals_m, states_m, value_m,
     goals_s, states_s, value_s, value_w, new_hidden) = out
    jax.block_until_ready((action_dist, value_m, value_s, value_w,
                           goals_m[-1], goals_s[-1], new_hidden))

    assert action_dist.shape == (B, na)
    assert value_m.shape == (B, 1) and value_s.shape == (B, 1) and value_w.shape == (B, 1)
    assert new_hidden["m"].shape == (B, 2 * r_m * d)
    assert new_hidden["s"].shape == (B, 2 * r_s * d)
    assert new_hidden["w"].shape == (B, 2 * d * na)
    assert bool(jnp.all(jnp.isfinite(action_dist)))
    assert bool(jnp.allclose(jnp.sum(action_dist, axis=-1), 1.0, atol=1e-4))
    print("KERNEL_OK")
</pallas_src>

<mosaic_0001>
module attributes {stable_mosaic.version = 11 : i64} {
  func.func @mpnets_fused_kernel(%arg0: memref<2xi32, #tpu.memory_space<smem>>, %arg1: memref<8x48xf32, #tpu.memory_space<vmem>>, %arg2: memref<8x1xf32, #tpu.memory_space<vmem>>, %arg3: memref<8x256xf32, #tpu.memory_space<vmem>>, %arg4: memref<8x128xf32, #tpu.memory_space<vmem>>, %arg5: memref<8x256xf32, #tpu.memory_space<vmem>>, %arg6: memref<8x32xf32, #tpu.memory_space<vmem>>, %arg7: memref<8x32xf32, #tpu.memory_space<vmem>>, %arg8: memref<8x32xf32, #tpu.memory_space<vmem>>, %arg9: memref<256x1792xbf16, #tpu.memory_space<vmem>>, %arg10: memref<1x1920xf32, #tpu.memory_space<vmem>>, %arg11: memref<8x256xf32, #tpu.memory_space<vmem>>, %arg12: memref<8x256xf32, #tpu.memory_space<vmem>>, %arg13: memref<8x128xf32, #tpu.memory_space<vmem>>, %arg14: memref<8x256xf32, #tpu.memory_space<vmem>>) attributes {dimension_semantics = [], scalar_prefetch = 0 : i64, scratch_operands = 0 : i64, tpu.core_type = #tpu.core_type<tc>} {
    %c0 = arith.constant 0 : index
    %0 = memref.load %arg0[%c0] : memref<2xi32, #tpu.memory_space<smem>>
    %c1 = arith.constant 1 : index
    %1 = memref.load %arg0[%c1] : memref<2xi32, #tpu.memory_space<smem>>
    %c0_0 = arith.constant 0 : index
    %c0_1 = arith.constant 0 : index
    %2 = vector.load %arg2[%c0_0, %c0_1] : memref<8x1xf32, #tpu.memory_space<vmem>>, vector<8x1xf32>
    %c0_2 = arith.constant 0 : index
    %c0_3 = arith.constant 0 : index
    %3 = vector.load %arg6[%c0_2, %c0_3] : memref<8x32xf32, #tpu.memory_space<vmem>>, vector<8x32xf32>
    %c0_4 = arith.constant 0 : index
    %c0_5 = arith.constant 0 : index
    %4 = vector.load %arg7[%c0_4, %c0_5] : memref<8x32xf32, #tpu.memory_space<vmem>>, vector<8x32xf32>
    %5 = arith.addf %3, %4 : vector<8x32xf32>
    %c0_6 = arith.constant 0 : index
    %c0_7 = arith.constant 0 : index
    %6 = vector.load %arg8[%c0_6, %c0_7] : memref<8x32xf32, #tpu.memory_space<vmem>>, vector<8x32xf32>
    %7 = arith.addf %5, %6 : vector<8x32xf32>
    %c0_8 = arith.constant 0 : index
    %c0_9 = arith.constant 0 : index
    %8 = vector.load %arg3[%c0_8, %c0_9] : memref<8x256xf32, #tpu.memory_space<vmem>>, vector<8x256xf32>
    %c0_10 = arith.constant 0 : index
    %c0_11 = arith.constant 0 : index
    %9 = vector.load %arg4[%c0_10, %c0_11] : memref<8x128xf32, #tpu.memory_space<vmem>>, vector<8x128xf32>
    %c0_12 = arith.constant 0 : index
    %c0_13 = arith.constant 0 : index
    %10 = vector.load %arg5[%c0_12, %c0_13] : memref<8x256xf32, #tpu.memory_space<vmem>>, vector<8x256xf32>
    %11 = vector.extract_strided_slice %8 {offsets = [0, 0], sizes = [8, 128], strides = [1, 1]} : vector<8x256xf32> to vector<8x128xf32>
    %12 = vector.broadcast %2 : vector<8x1xf32> to vector<8x128xf32>
    %13 = arith.mulf %11, %12 : vector<8x128xf32>
    %14 = vector.extract_strided_slice %8 {offsets = [0, 128], sizes = [8, 128], strides = [1, 1]} : vector<8x256xf32> to vector<8x128xf32>
    %15 = vector.broadcast %2 : vector<8x1xf32> to vector<8x128xf32>
    %16 = arith.mulf %14, %15 : vector<8x128xf32>
    %17 = vector.extract_strided_slice %9 {offsets = [0, 0], sizes = [8, 64], strides = [1, 1]} : vector<8x128xf32> to vector<8x64xf32>
    %18 = vector.broadcast %2 : vector<8x1xf32> to vector<8x64xf32>
    %19 = arith.mulf %17, %18 : vector<8x64xf32>
    %20 = vector.extract_strided_slice %9 {offsets = [0, 64], sizes = [8, 64], strides = [1, 1]} : vector<8x128xf32> to vector<8x64xf32>
    %21 = vector.broadcast %2 : vector<8x1xf32> to vector<8x64xf32>
    %22 = arith.mulf %20, %21 : vector<8x64xf32>
    %23 = vector.extract_strided_slice %10 {offsets = [0, 0], sizes = [8, 128], strides = [1, 1]} : vector<8x256xf32> to vector<8x128xf32>
    %24 = vector.broadcast %2 : vector<8x1xf32> to vector<8x128xf32>
    %25 = arith.mulf %23, %24 : vector<8x128xf32>
    %26 = vector.extract_strided_slice %10 {offsets = [0, 128], sizes = [8, 128], strides = [1, 1]} : vector<8x256xf32> to vector<8x128xf32>
    %27 = vector.broadcast %2 : vector<8x1xf32> to vector<8x128xf32>
    %28 = arith.mulf %26, %27 : vector<8x128xf32>
    %29 = tpu.iota {dimensions = array<i32: 1>} : vector<8x128xi32>
    %c32_i32 = arith.constant 32 : i32
    %30 = arith.muli %0, %c32_i32 : i32
    %31 = vector.broadcast %30 : i32 to vector<8x128xi32>
    %32 = arith.cmpi sge, %29, %31 : vector<8x128xi32>
    %c32_i32_14 = arith.constant 32 : i32
    %33 = arith.addi %30, %c32_i32_14 : i32
    %34 = vector.broadcast %33 : i32 to vector<8x128xi32>
    %35 = arith.cmpi slt, %29, %34 : vector<8x128xi32>
    %36 = arith.andi %32, %35 : vector<8x128xi1>
    %cst = arith.constant 0.000000e+00 : f32
    %37 = vector.broadcast %cst : f32 to vector<8x128xf32>
    %38 = arith.select %36, %13, %37 : vector<8x128xi1>, vector<8x128xf32>
    %cst_15 = arith.constant 0.000000e+00 : f32
    %39 = vector.broadcast %cst_15 : f32 to vector<8x128xf32>
    %40 = arith.select %36, %16, %39 : vector<8x128xi1>, vector<8x128xf32>
    %41 = vector.extract_strided_slice %38 {offsets = [0, 0], sizes = [8, 32], strides = [1, 1]} : vector<8x128xf32> to vector<8x32xf32>
    %42 = vector.extract_strided_slice %40 {offsets = [0, 0], sizes = [8, 32], strides = [1, 1]} : vector<8x128xf32> to vector<8x32xf32>
    %43 = vector.extract_strided_slice %38 {offsets = [0, 32], sizes = [8, 32], strides = [1, 1]} : vector<8x128xf32> to vector<8x32xf32>
    %44 = arith.addf %41, %43 : vector<8x32xf32>
    %45 = vector.extract_strided_slice %40 {offsets = [0, 32], sizes = [8, 32], strides = [1, 1]} : vector<8x128xf32> to vector<8x32xf32>
    %46 = arith.addf %42, %45 : vector<8x32xf32>
    %47 = vector.extract_strided_slice %38 {offsets = [0, 64], sizes = [8, 32], strides = [1, 1]} : vector<8x128xf32> to vector<8x32xf32>
    %48 = arith.addf %44, %47 : vector<8x32xf32>
    %49 = vector.extract_strided_slice %40 {offsets = [0, 64], sizes = [8, 32], strides = [1, 1]} : vector<8x128xf32> to vector<8x32xf32>
    %50 = arith.addf %46, %49 : vector<8x32xf32>
    %51 = vector.extract_strided_slice %38 {offsets = [0, 96], sizes = [8, 32], strides = [1, 1]} : vector<8x128xf32> to vector<8x32xf32>
    %52 = arith.addf %48, %51 : vector<8x32xf32>
    %53 = vector.extract_strided_slice %40 {offsets = [0, 96], sizes = [8, 32], strides = [1, 1]} : vector<8x128xf32> to vector<8x32xf32>
    %54 = arith.addf %50, %53 : vector<8x32xf32>
    %55 = tpu.iota {dimensions = array<i32: 1>} : vector<8x64xi32>
    %c32_i32_16 = arith.constant 32 : i32
    %56 = arith.muli %1, %c32_i32_16 : i32
    %57 = vector.broadcast %56 : i32 to vector<8x64xi32>
    %58 = arith.cmpi sge, %55, %57 : vector<8x64xi32>
    %c32_i32_17 = arith.constant 32 : i32
    %59 = arith.addi %56, %c32_i32_17 : i32
    %60 = vector.broadcast %59 : i32 to vector<8x64xi32>
    %61 = arith.cmpi slt, %55, %60 : vector<8x64xi32>
    %62 = arith.andi %58, %61 : vector<8x64xi1>
    %cst_18 = arith.constant 0.000000e+00 : f32
    %63 = vector.broadcast %cst_18 : f32 to vector<8x64xf32>
    %64 = arith.select %62, %19, %63 : vector<8x64xi1>, vector<8x64xf32>
    %cst_19 = arith.constant 0.000000e+00 : f32
    %65 = vector.broadcast %cst_19 : f32 to vector<8x64xf32>
    %66 = arith.select %62, %22, %65 : vector<8x64xi1>, vector<8x64xf32>
    %67 = vector.extract_strided_slice %64 {offsets = [0, 0], sizes = [8, 32], strides = [1, 1]} : vector<8x64xf32> to vector<8x32xf32>
    %68 = vector.extract_strided_slice %66 {offsets = [0, 0], sizes = [8, 32], strides = [1, 1]} : vector<8x64xf32> to vector<8x32xf32>
    %69 = vector.extract_strided_slice %64 {offsets = [0, 32], sizes = [8, 32], strides = [1, 1]} : vector<8x64xf32> to vector<8x32xf32>
    %70 = arith.addf %67, %69 : vector<8x32xf32>
    %71 = vector.extract_strided_slice %66 {offsets = [0, 32], sizes = [8, 32], strides = [1, 1]} : vector<8x64xf32> to vector<8x32xf32>
    %72 = arith.addf %68, %71 : vector<8x32xf32>
    %c0_20 = arith.constant 0 : index
    %c0_21 = arith.constant 0 : index
    %73 = vector.load %arg1[%c0_20, %c0_21] : memref<8x48xf32, #tpu.memory_space<vmem>>, vector<8x48xf32>
    %c0_22 = arith.constant 0 : index
    %c0_23 = arith.constant 0 : index
    %74 = vector.load %arg9[%c0_22, %c0_23] : memref<256x1792xbf16, #tpu.memory_space<vmem>>, vector<48x256xbf16>
    %75 = arith.truncf %73 : vector<8x48xf32> to vector<8x48xbf16>
    %cst_24 = arith.constant dense<0.000000e+00> : vector<8x256xf32>
    %76 = tpu.matmul %75, %74, %cst_24 {dimension_numbers = #tpu.dot_dimension_numbers<[1], [0], [0], [1], [0, 0, 1, 1], [], []>} : vector<8x48xbf16>, vector<48x256xbf16>, vector<8x256xf32> -> vector<8x256xf32>
    %c0_25 = arith.constant 0 : index
    %c0_26 = arith.constant 0 : index
    %77 = vector.load %arg10[%c0_25, %c0_26] : memref<1x1920xf32, #tpu.memory_space<vmem>>, vector<1x256xf32>
    %78 = vector.broadcast %77 : vector<1x256xf32> to vector<8x256xf32>
    %79 = arith.addf %76, %78 : vector<8x256xf32>
    %cst_27 = arith.constant 0.000000e+00 : f32
    %80 = vector.broadcast %cst_27 : f32 to vector<8x256xf32>
    %81 = arith.maximumf %79, %80 : vector<8x256xf32>
    %c0_28 = arith.constant 0 : index
    %c256 = arith.constant 256 : index
    %82 = vector.load %arg9[%c0_28, %c256] : memref<256x1792xbf16, #tpu.memory_space<vmem>>, vector<256x32xbf16>
    %83 = arith.truncf %81 : vector<8x256xf32> to vector<8x256xbf16>
    %cst_29 = arith.constant dense<0.000000e+00> : vector<8x32xf32>
    %84 = tpu.matmul %83, %82, %cst_29 {dimension_numbers = #tpu.dot_dimension_numbers<[1], [0], [0], [1], [0, 0, 1, 1], [], []>} : vector<8x256xbf16>, vector<256x32xbf16>, vector<8x32xf32> -> vector<8x32xf32>
    %c0_30 = arith.constant 0 : index
    %c256_31 = arith.constant 256 : index
    %85 = vector.load %arg10[%c0_30, %c256_31] : memref<1x1920xf32, #tpu.memory_space<vmem>>, vector<1x32xf32>
    %86 = vector.broadcast %85 : vector<1x32xf32> to vector<8x32xf32>
    %87 = arith.addf %84, %86 : vector<8x32xf32>
    %cst_32 = arith.constant 0.000000e+00 : f32
    %88 = vector.broadcast %cst_32 : f32 to vector<8x32xf32>
    %89 = arith.maximumf %87, %88 : vector<8x32xf32>
    %90 = tpu.concatenate %89, %25, %52, %70, %7 in 1 : vector<8x32xf32>, vector<8x128xf32>, vector<8x32xf32>, vector<8x32xf32>, vector<8x32xf32> -> vector<8x256xf32>
    %c0_33 = arith.constant 0 : index
    %c384 = arith.constant 384 : index
    %91 = vector.load %arg9[%c0_33, %c384] : memref<256x1792xbf16, #tpu.memory_space<vmem>>, vector<256x1024xbf16>
    %92 = arith.truncf %90 : vector<8x256xf32> to vector<8x256xbf16>
    %cst_34 = arith.constant dense<0.000000e+00> : vector<8x1024xf32>
    %93 = tpu.matmul %92, %91, %cst_34 {dimension_numbers = #tpu.dot_dimension_numbers<[1], [0], [0], [1], [0, 0, 1, 1], [], []>} : vector<8x256xbf16>, vector<256x1024xbf16>, vector<8x1024xf32> -> vector<8x1024xf32>
    %94 = vector.extract_strided_slice %93 {offsets = [0, 0], sizes = [8, 512], strides = [1, 1]} : vector<8x1024xf32> to vector<8x512xf32>
    %c0_35 = arith.constant 0 : index
    %c768 = arith.constant 768 : index
    %95 = vector.load %arg10[%c0_35, %c768] : memref<1x1920xf32, #tpu.memory_space<vmem>>, vector<1x512xf32>
    %96 = vector.broadcast %95 : vector<1x512xf32> to vector<8x512xf32>
    %97 = arith.addf %94, %96 : vector<8x512xf32>
    %98 = vector.extract_strided_slice %93 {offsets = [0, 512], sizes = [8, 64], strides = [1, 1]} : vector<8x1024xf32> to vector<8x64xf32>
    %c0_36 = arith.constant 0 : index
    %c384_37 = arith.constant 384 : index
    %99 = vector.load %arg10[%c0_36, %c384_37] : memref<1x1920xf32, #tpu.memory_space<vmem>>, vector<1x64xf32>
    %100 = vector.broadcast %99 : vector<1x64xf32> to vector<8x64xf32>
    %101 = arith.addf %98, %100 : vector<8x64xf32>
    %cst_38 = arith.constant 0.000000e+00 : f32
    %102 = vector.broadcast %cst_38 : f32 to vector<8x64xf32>
    %103 = arith.maximumf %101, %102 : vector<8x64xf32>
    %104 = vector.extract_strided_slice %103 {offsets = [0, 0], sizes = [8, 32], strides = [1, 1]} : vector<8x64xf32> to vector<8x32xf32>
    %105 = vector.extract_strided_slice %103 {offsets = [0, 32], sizes = [8, 32], strides = [1, 1]} : vector<8x64xf32> to vector<8x32xf32>
    %106 = vector.extract_strided_slice %93 {offsets = [0, 640], sizes = [8, 128], strides = [1, 1]} : vector<8x1024xf32> to vector<8x128xf32>
    %107 = vector.extract_strided_slice %93 {offsets = [0, 768], sizes = [8, 128], strides = [1, 1]} : vector<8x1024xf32> to vector<8x128xf32>
    %108 = vector.extract_strided_slice %93 {offsets = [0, 896], sizes = [8, 128], strides = [1, 1]} : vector<8x1024xf32> to vector<8x128xf32>
    %109 = vector.extract_strided_slice %97 {offsets = [0, 0], sizes = [8, 128], strides = [1, 1]} : vector<8x512xf32> to vector<8x128xf32>
    %cst_39 = arith.constant 0.000000e+00 : f32
    %110 = vector.broadcast %cst_39 : f32 to vector<8x128xf32>
    %111 = arith.subf %110, %109 : vector<8x128xf32>
    %112 = math.exp %111 : vector<8x128xf32>
    %cst_40 = arith.constant 1.000000e+00 : f32
    %113 = vector.broadcast %cst_40 : f32 to vector<8x128xf32>
    %114 = arith.addf %113, %112 : vector<8x128xf32>
    %cst_41 = arith.constant 1.000000e+00 : f32
    %115 = vector.broadcast %cst_41 : f32 to vector<8x128xf32>
    %116 = arith.divf %115, %114 : vector<8x128xf32>
    %117 = vector.extract_strided_slice %97 {offsets = [0, 128], sizes = [8, 128], strides = [1, 1]} : vector<8x512xf32> to vector<8x128xf32>
    %cst_42 = arith.constant 0.000000e+00 : f32
    %118 = vector.broadcast %cst_42 : f32 to vector<8x128xf32>
    %119 = arith.subf %118, %117 : vector<8x128xf32>
    %120 = math.exp %119 : vector<8x128xf32>
    %cst_43 = arith.constant 1.000000e+00 : f32
    %121 = vector.broadcast %cst_43 : f32 to vector<8x128xf32>
    %122 = arith.addf %121, %120 : vector<8x128xf32>
    %cst_44 = arith.constant 1.000000e+00 : f32
    %123 = vector.broadcast %cst_44 : f32 to vector<8x128xf32>
    %124 = arith.divf %123, %122 : vector<8x128xf32>
    %125 = vector.extract_strided_slice %97 {offsets = [0, 256], sizes = [8, 128], strides = [1, 1]} : vector<8x512xf32> to vector<8x128xf32>
    %126 = math.tanh %125 : vector<8x128xf32>
    %127 = vector.extract_strided_slice %97 {offsets = [0, 384], sizes = [8, 128], strides = [1, 1]} : vector<8x512xf32> to vector<8x128xf32>
    %cst_45 = arith.constant 0.000000e+00 : f32
    %128 = vector.broadcast %cst_45 : f32 to vector<8x128xf32>
    %129 = arith.subf %128, %127 : vector<8x128xf32>
    %130 = math.exp %129 : vector<8x128xf32>
    %cst_46 = arith.constant 1.000000e+00 : f32
    %131 = vector.broadcast %cst_46 : f32 to vector<8x128xf32>
    %132 = arith.addf %131, %130 : vector<8x128xf32>
    %cst_47 = arith.constant 1.000000e+00 : f32
    %133 = vector.broadcast %cst_47 : f32 to vector<8x128xf32>
    %134 = arith.divf %133, %132 : vector<8x128xf32>
    %135 = arith.mulf %124, %28 : vector<8x128xf32>
    %136 = arith.mulf %116, %126 : vector<8x128xf32>
    %137 = arith.addf %135, %136 : vector<8x128xf32>
    %138 = math.tanh %137 : vector<8x128xf32>
    %139 = arith.mulf %134, %138 : vector<8x128xf32>
    %c0_48 = arith.constant 0 : index
    %c1408 = arith.constant 1408 : index
    %140 = vector.load %arg9[%c0_48, %c1408] : memref<256x1792xbf16, #tpu.memory_space<vmem>>, vector<64x256xbf16>
    %141 = arith.truncf %103 : vector<8x64xf32> to vector<8x64xbf16>
    %cst_49 = arith.constant dense<0.000000e+00> : vector<8x256xf32>
    %142 = tpu.matmul %141, %140, %cst_49 {dimension_numbers = #tpu.dot_dimension_numbers<[1], [0], [0], [1], [0, 0, 1, 1], [], []>} : vector<8x64xbf16>, vector<64x256xbf16>, vector<8x256xf32> -> vector<8x256xf32>
    %143 = vector.extract_strided_slice %142 {offsets = [0, 0], sizes = [8, 128], strides = [1, 1]} : vector<8x256xf32> to vector<8x128xf32>
    %144 = arith.addf %143, %106 : vector<8x128xf32>
    %c0_50 = arith.constant 0 : index
    %c512 = arith.constant 512 : index
    %145 = vector.load %arg10[%c0_50, %c512] : memref<1x1920xf32, #tpu.memory_space<vmem>>, vector<1x128xf32>
    %146 = vector.broadcast %145 : vector<1x128xf32> to vector<8x128xf32>
    %147 = arith.addf %144, %146 : vector<8x128xf32>
    %148 = vector.extract_strided_slice %142 {offsets = [0, 128], sizes = [8, 128], strides = [1, 1]} : vector<8x256xf32> to vector<8x128xf32>
    %149 = arith.addf %148, %107 : vector<8x128xf32>
    %c0_51 = arith.constant 0 : index
    %c640 = arith.constant 640 : index
    %150 = vector.load %arg10[%c0_51, %c640] : memref<1x1920xf32, #tpu.memory_space<vmem>>, vector<1x128xf32>
    %151 = vector.broadcast %150 : vector<1x128xf32> to vector<8x128xf32>
    %152 = arith.addf %149, %151 : vector<8x128xf32>
    %153 = vector.extract_strided_slice %147 {offsets = [0, 0], sizes = [8, 32], strides = [1, 1]} : vector<8x128xf32> to vector<8x32xf32>
    %cst_52 = arith.constant 0.000000e+00 : f32
    %154 = vector.broadcast %cst_52 : f32 to vector<8x32xf32>
    %155 = arith.subf %154, %153 : vector<8x32xf32>
    %156 = math.exp %155 : vector<8x32xf32>
    %cst_53 = arith.constant 1.000000e+00 : f32
    %157 = vector.broadcast %cst_53 : f32 to vector<8x32xf32>
    %158 = arith.addf %157, %156 : vector<8x32xf32>
    %cst_54 = arith.constant 1.000000e+00 : f32
    %159 = vector.broadcast %cst_54 : f32 to vector<8x32xf32>
    %160 = arith.divf %159, %158 : vector<8x32xf32>
    %161 = vector.extract_strided_slice %147 {offsets = [0, 32], sizes = [8, 32], strides = [1, 1]} : vector<8x128xf32> to vector<8x32xf32>
    %cst_55 = arith.constant 0.000000e+00 : f32
    %162 = vector.broadcast %cst_55 : f32 to vector<8x32xf32>
    %163 = arith.subf %162, %161 : vector<8x32xf32>
    %164 = math.exp %163 : vector<8x32xf32>
    %cst_56 = arith.constant 1.000000e+00 : f32
    %165 = vector.broadcast %cst_56 : f32 to vector<8x32xf32>
    %166 = arith.addf %165, %164 : vector<8x32xf32>
    %cst_57 = arith.constant 1.000000e+00 : f32
    %167 = vector.broadcast %cst_57 : f32 to vector<8x32xf32>
    %168 = arith.divf %167, %166 : vector<8x32xf32>
    %169 = vector.extract_strided_slice %147 {offsets = [0, 64], sizes = [8, 32], strides = [1, 1]} : vector<8x128xf32> to vector<8x32xf32>
    %170 = math.tanh %169 : vector<8x32xf32>
    %171 = vector.extract_strided_slice %147 {offsets = [0, 96], sizes = [8, 32], strides = [1, 1]} : vector<8x128xf32> to vector<8x32xf32>
    %cst_58 = arith.constant 0.000000e+00 : f32
    %172 = vector.broadcast %cst_58 : f32 to vector<8x32xf32>
    %173 = arith.subf %172, %171 : vector<8x32xf32>
    %174 = math.exp %173 : vector<8x32xf32>
    %cst_59 = arith.constant 1.000000e+00 : f32
    %175 = vector.broadcast %cst_59 : f32 to vector<8x32xf32>
    %176 = arith.addf %175, %174 : vector<8x32xf32>
    %cst_60 = arith.constant 1.000000e+00 : f32
    %177 = vector.broadcast %cst_60 : f32 to vector<8x32xf32>
    %178 = arith.divf %177, %176 : vector<8x32xf32>
    %179 = arith.mulf %168, %54 : vector<8x32xf32>
    %180 = arith.mulf %160, %170 : vector<8x32xf32>
    %181 = arith.addf %179, %180 : vector<8x32xf32>
    %182 = math.tanh %181 : vector<8x32xf32>
    %183 = arith.mulf %178, %182 : vector<8x32xf32>
    %184 = tpu.concatenate %183, %183, %183, %183 in 1 : vector<8x32xf32>, vector<8x32xf32>, vector<8x32xf32>, vector<8x32xf32> -> vector<8x128xf32>
    %185 = arith.select %36, %184, %13 : vector<8x128xi1>, vector<8x128xf32>
    %186 = tpu.concatenate %181, %181, %181, %181 in 1 : vector<8x32xf32>, vector<8x32xf32>, vector<8x32xf32>, vector<8x32xf32> -> vector<8x128xf32>
    %187 = arith.select %36, %186, %16 : vector<8x128xi1>, vector<8x128xf32>
    %188 = vector.extract_strided_slice %185 {offsets = [0, 0], sizes = [8, 32], strides = [1, 1]} : vector<8x128xf32> to vector<8x32xf32>
    %189 = vector.extract_strided_slice %185 {offsets = [0, 32], sizes = [8, 32], strides = [1, 1]} : vector<8x128xf32> to vector<8x32xf32>
    %190 = arith.addf %188, %189 : vector<8x32xf32>
    %191 = vector.extract_strided_slice %185 {offsets = [0, 64], sizes = [8, 32], strides = [1, 1]} : vector<8x128xf32> to vector<8x32xf32>
    %192 = arith.addf %190, %191 : vector<8x32xf32>
    %193 = vector.extract_strided_slice %185 {offsets = [0, 96], sizes = [8, 32], strides = [1, 1]} : vector<8x128xf32> to vector<8x32xf32>
    %194 = arith.addf %192, %193 : vector<8x32xf32>
    %cst_61 = arith.constant 2.500000e-01 : f32
    %195 = vector.broadcast %cst_61 : f32 to vector<8x32xf32>
    %196 = arith.mulf %194, %195 : vector<8x32xf32>
    %197 = vector.extract_strided_slice %152 {offsets = [0, 0], sizes = [8, 32], strides = [1, 1]} : vector<8x128xf32> to vector<8x32xf32>
    %cst_62 = arith.constant 0.000000e+00 : f32
    %198 = vector.broadcast %cst_62 : f32 to vector<8x32xf32>
    %199 = arith.subf %198, %197 : vector<8x32xf32>
    %200 = math.exp %199 : vector<8x32xf32>
    %cst_63 = arith.constant 1.000000e+00 : f32
    %201 = vector.broadcast %cst_63 : f32 to vector<8x32xf32>
    %202 = arith.addf %201, %200 : vector<8x32xf32>
    %cst_64 = arith.constant 1.000000e+00 : f32
    %203 = vector.broadcast %cst_64 : f32 to vector<8x32xf32>
    %204 = arith.divf %203, %202 : vector<8x32xf32>
    %205 = vector.extract_strided_slice %152 {offsets = [0, 32], sizes = [8, 32], strides = [1, 1]} : vector<8x128xf32> to vector<8x32xf32>
    %cst_65 = arith.constant 0.000000e+00 : f32
    %206 = vector.broadcast %cst_65 : f32 to vector<8x32xf32>
    %207 = arith.subf %206, %205 : vector<8x32xf32>
    %208 = math.exp %207 : vector<8x32xf32>
    %cst_66 = arith.constant 1.000000e+00 : f32
    %209 = vector.broadcast %cst_66 : f32 to vector<8x32xf32>
    %210 = arith.addf %209, %208 : vector<8x32xf32>
    %cst_67 = arith.constant 1.000000e+00 : f32
    %211 = vector.broadcast %cst_67 : f32 to vector<8x32xf32>
    %212 = arith.divf %211, %210 : vector<8x32xf32>
    %213 = vector.extract_strided_slice %152 {offsets = [0, 64], sizes = [8, 32], strides = [1, 1]} : vector<8x128xf32> to vector<8x32xf32>
    %214 = math.tanh %213 : vector<8x32xf32>
    %215 = vector.extract_strided_slice %152 {offsets = [0, 96], sizes = [8, 32], strides = [1, 1]} : vector<8x128xf32> to vector<8x32xf32>
    %cst_68 = arith.constant 0.000000e+00 : f32
    %216 = vector.broadcast %cst_68 : f32 to vector<8x32xf32>
    %217 = arith.subf %216, %215 : vector<8x32xf32>
    %218 = math.exp %217 : vector<8x32xf32>
    %cst_69 = arith.constant 1.000000e+00 : f32
    %219 = vector.broadcast %cst_69 : f32 to vector<8x32xf32>
    %220 = arith.addf %219, %218 : vector<8x32xf32>
    %cst_70 = arith.constant 1.000000e+00 : f32
    %221 = vector.broadcast %cst_70 : f32 to vector<8x32xf32>
    %222 = arith.divf %221, %220 : vector<8x32xf32>
    %223 = arith.mulf %212, %72 : vector<8x32xf32>
    %224 = arith.mulf %204, %214 : vector<8x32xf32>
    %225 = arith.addf %223, %224 : vector<8x32xf32>
    %226 = math.tanh %225 : vector<8x32xf32>
    %227 = arith.mulf %222, %226 : vector<8x32xf32>
    %228 = tpu.concatenate %227, %227 in 1 : vector<8x32xf32>, vector<8x32xf32> -> vector<8x64xf32>
    %229 = arith.select %62, %228, %19 : vector<8x64xi1>, vector<8x64xf32>
    %230 = tpu.concatenate %225, %225 in 1 : vector<8x32xf32>, vector<8x32xf32> -> vector<8x64xf32>
    %231 = arith.select %62, %230, %22 : vector<8x64xi1>, vector<8x64xf32>
    %232 = vector.extract_strided_slice %229 {offsets = [0, 0], sizes = [8, 32], strides = [1, 1]} : vector<8x64xf32> to vector<8x32xf32>
    %233 = vector.extract_strided_slice %229 {offsets = [0, 32], sizes = [8, 32], strides = [1, 1]} : vector<8x64xf32> to vector<8x32xf32>
    %234 = arith.addf %232, %233 : vector<8x32xf32>
    %cst_71 = arith.constant 5.000000e-01 : f32
    %235 = vector.broadcast %cst_71 : f32 to vector<8x32xf32>
    %236 = arith.mulf %234, %235 : vector<8x32xf32>
    %c0_72 = arith.constant 0 : index
    %c1408_73 = arith.constant 1408 : index
    %237 = vector.load %arg10[%c0_72, %c1408_73] : memref<1x1920xf32, #tpu.memory_space<vmem>>, vector<1x32xf32>
    %238 = vector.broadcast %237 : vector<1x32xf32> to vector<8x32xf32>
    %239 = arith.mulf %196, %238 : vector<8x32xf32>
    %cst_74 = arith.constant dense<0.000000e+00> : vector<8xf32>
    %240 = vector.multi_reduction <add>, %239, %cst_74 [1] : vector<8x32xf32> to vector<8xf32>
    %241 = vector.shape_cast %240 : vector<8xf32> to vector<8x1xf32>
    %c0_75 = arith.constant 0 : index
    %c1792 = arith.constant 1792 : index
    %242 = vector.load %arg10[%c0_75, %c1792] : memref<1x1920xf32, #tpu.memory_space<vmem>>, vector<1x1xf32>
    %243 = vector.broadcast %242 : vector<1x1xf32> to vector<8x1xf32>
    %244 = arith.addf %241, %243 : vector<8x1xf32>
    %245 = arith.mulf %196, %196 : vector<8x32xf32>
    %cst_76 = arith.constant dense<0.000000e+00> : vector<8xf32>
    %246 = vector.multi_reduction <add>, %245, %cst_76 [1] : vector<8x32xf32> to vector<8xf32>
    %247 = vector.shape_cast %246 : vector<8xf32> to vector<8x1xf32>
    %cst_77 = arith.constant 1.000000e-24 : f32
    %248 = vector.broadcast %cst_77 : f32 to vector<8x1xf32>
    %249 = arith.maximumf %247, %248 : vector<8x1xf32>
    %250 = math.rsqrt %249 : vector<8x1xf32>
    %251 = vector.broadcast %250 : vector<8x1xf32> to vector<8x32xf32>
    %252 = arith.mulf %196, %251 : vector<8x32xf32>
    %253 = tpu.concatenate %252, %139 in 1 : vector<8x32xf32>, vector<8x128xf32> -> vector<8x160xf32>
    %c0_78 = arith.constant 0 : index
    %c1664 = arith.constant 1664 : index
    %254 = vector.load %arg9[%c0_78, %c1664] : memref<256x1792xbf16, #tpu.memory_space<vmem>>, vector<160x128xbf16>
    %255 = arith.truncf %253 : vector<8x160xf32> to vector<8x160xbf16>
    %cst_79 = arith.constant dense<0.000000e+00> : vector<8x128xf32>
    %256 = tpu.matmul %255, %254, %cst_79 {dimension_numbers = #tpu.dot_dimension_numbers<[1], [0], [0], [1], [0, 0, 1, 1], [], []>} : vector<8x160xbf16>, vector<160x128xbf16>, vector<8x128xf32> -> vector<8x128xf32>
    %257 = vector.extract_strided_slice %256 {offsets = [0, 0], sizes = [8, 32], strides = [1, 1]} : vector<8x128xf32> to vector<8x32xf32>
    %258 = vector.extract_strided_slice %256 {offsets = [0, 32], sizes = [8, 50], strides = [1, 1]} : vector<8x128xf32> to vector<8x50xf32>
    %c0_80 = arith.constant 0 : index
    %c1280 = arith.constant 1280 : index
    %259 = vector.load %arg10[%c0_80, %c1280] : memref<1x1920xf32, #tpu.memory_space<vmem>>, vector<1x50xf32>
    %260 = vector.broadcast %259 : vector<1x50xf32> to vector<8x50xf32>
    %261 = arith.addf %258, %260 : vector<8x50xf32>
    %cst_81 = arith.constant 0.000000e+00 : f32
    %262 = vector.broadcast %cst_81 : f32 to vector<8x50xf32>
    %263 = arith.maximumf %261, %262 : vector<8x50xf32>
    %264 = arith.addf %257, %236 : vector<8x32xf32>
    %c0_82 = arith.constant 0 : index
    %c1536 = arith.constant 1536 : index
    %265 = vector.load %arg10[%c0_82, %c1536] : memref<1x1920xf32, #tpu.memory_space<vmem>>, vector<1x32xf32>
    %266 = vector.broadcast %265 : vector<1x32xf32> to vector<8x32xf32>
    %267 = arith.mulf %264, %266 : vector<8x32xf32>
    %cst_83 = arith.constant dense<0.000000e+00> : vector<8xf32>
    %268 = vector.multi_reduction <add>, %267, %cst_83 [1] : vector<8x32xf32> to vector<8xf32>
    %269 = vector.shape_cast %268 : vector<8xf32> to vector<8x1xf32>
    %c0_84 = arith.constant 0 : index
    %c1793 = arith.constant 1793 : index
    %270 = vector.load %arg10[%c0_84, %c1793] : memref<1x1920xf32, #tpu.memory_space<vmem>>, vector<1x1xf32>
    %271 = vector.broadcast %270 : vector<1x1xf32> to vector<8x1xf32>
    %272 = arith.addf %269, %271 : vector<8x1xf32>
    %273 = arith.mulf %264, %264 : vector<8x32xf32>
    %cst_85 = arith.constant dense<0.000000e+00> : vector<8xf32>
    %274 = vector.multi_reduction <add>, %273, %cst_85 [1] : vector<8x32xf32> to vector<8xf32>
    %275 = vector.shape_cast %274 : vector<8xf32> to vector<8x1xf32>
    %cst_86 = arith.constant 1.000000e-24 : f32
    %276 = vector.broadcast %cst_86 : f32 to vector<8x1xf32>
    %277 = arith.maximumf %275, %276 : vector<8x1xf32>
    %278 = math.rsqrt %277 : vector<8x1xf32>
    %279 = vector.broadcast %278 : vector<8x1xf32> to vector<8x32xf32>
    %280 = arith.mulf %264, %279 : vector<8x32xf32>
    %c0_87 = arith.constant 0 : index
    %c1664_88 = arith.constant 1664 : index
    %281 = vector.load %arg10[%c0_87, %c1664_88] : memref<1x1920xf32, #tpu.memory_space<vmem>>, vector<1x50xf32>
    %282 = vector.broadcast %281 : vector<1x50xf32> to vector<8x50xf32>
    %283 = arith.mulf %263, %282 : vector<8x50xf32>
    %cst_89 = arith.constant dense<0.000000e+00> : vector<8xf32>
    %284 = vector.multi_reduction <add>, %283, %cst_89 [1] : vector<8x50xf32> to vector<8xf32>
    %285 = vector.shape_cast %284 : vector<8xf32> to vector<8x1xf32>
    %c0_90 = arith.constant 0 : index
    %c1794 = arith.constant 1794 : index
    %286 = vector.load %arg10[%c0_90, %c1794] : memref<1x1920xf32, #tpu.memory_space<vmem>>, vector<1x1xf32>
    %287 = vector.broadcast %286 : vector<1x1xf32> to vector<8x1xf32>
    %288 = arith.addf %285, %287 : vector<8x1xf32>
    %289 = arith.mulf %108, %139 : vector<8x128xf32>
    %290 = tpu.iota {dimensions = array<i32: 1>} : vector<8x128xi32>
    %c4_i32 = arith.constant 4 : i32
    %c0_i32 = arith.constant 0 : i32
    %291 = arith.cmpi eq, %c4_i32, %c0_i32 : i32
    %c1_i32 = arith.constant 1 : i32
    %292 = arith.select %291, %c1_i32, %c4_i32 : i32
    %293 = vector.broadcast %292 : i32 to vector<8x128xi32>
    %294 = arith.remsi %290, %293 : vector<8x128xi32>
    %c0_i32_91 = arith.constant 0 : i32
    %295 = vector.broadcast %c0_i32_91 : i32 to vector<8x128xi32>
    %296 = arith.cmpi ne, %294, %295 : vector<8x128xi32>
    %c0_i32_92 = arith.constant 0 : i32
    %297 = vector.broadcast %c0_i32_92 : i32 to vector<8x128xi32>
    %298 = arith.cmpi slt, %294, %297 : vector<8x128xi32>
    %c0_i32_93 = arith.constant 0 : i32
    %299 = arith.cmpi slt, %292, %c0_i32_93 : i32
    %300 = vector.broadcast %299 : i1 to vector<8x128xi1>
    %301 = vector.broadcast %300 : vector<8x128xi1> to vector<8x128xi1>
    %302 = arith.xori %298, %301 : vector<8x128xi1>
    %303 = arith.andi %302, %296 : vector<8x128xi1>
    %304 = vector.broadcast %292 : i32 to vector<8x128xi32>
    %305 = arith.addi %294, %304 : vector<8x128xi32>
    %306 = arith.select %303, %305, %294 : vector<8x128xi1>, vector<8x128xi32>
    %c0_i32_94 = arith.constant 0 : i32
    %307 = vector.broadcast %c0_i32_94 : i32 to vector<8x128xi32>
    %308 = arith.cmpi eq, %306, %307 : vector<8x128xi32>
    %cst_95 = arith.constant 0.000000e+00 : f32
    %309 = vector.broadcast %cst_95 : f32 to vector<8x128xf32>
    %310 = arith.select %308, %289, %309 : vector<8x128xi1>, vector<8x128xf32>
    %cst_96 = arith.constant dense<0.000000e+00> : vector<8xf32>
    %311 = vector.multi_reduction <add>, %310, %cst_96 [1] : vector<8x128xf32> to vector<8xf32>
    %312 = vector.shape_cast %311 : vector<8xf32> to vector<8x1xf32>
    %c1_i32_97 = arith.constant 1 : i32
    %313 = vector.broadcast %c1_i32_97 : i32 to vector<8x128xi32>
    %314 = arith.cmpi eq, %306, %313 : vector<8x128xi32>
    %cst_98 = arith.constant 0.000000e+00 : f32
    %315 = vector.broadcast %cst_98 : f32 to vector<8x128xf32>
    %316 = arith.select %314, %289, %315 : vector<8x128xi1>, vector<8x128xf32>
    %cst_99 = arith.constant dense<0.000000e+00> : vector<8xf32>
    %317 = vector.multi_reduction <add>, %316, %cst_99 [1] : vector<8x128xf32> to vector<8xf32>
    %318 = vector.shape_cast %317 : vector<8xf32> to vector<8x1xf32>
    %c2_i32 = arith.constant 2 : i32
    %319 = vector.broadcast %c2_i32 : i32 to vector<8x128xi32>
    %320 = arith.cmpi eq, %306, %319 : vector<8x128xi32>
    %cst_100 = arith.constant 0.000000e+00 : f32
    %321 = vector.broadcast %cst_100 : f32 to vector<8x128xf32>
    %322 = arith.select %320, %289, %321 : vector<8x128xi1>, vector<8x128xf32>
    %cst_101 = arith.constant dense<0.000000e+00> : vector<8xf32>
    %323 = vector.multi_reduction <add>, %322, %cst_101 [1] : vector<8x128xf32> to vector<8xf32>
    %324 = vector.shape_cast %323 : vector<8xf32> to vector<8x1xf32>
    %c3_i32 = arith.constant 3 : i32
    %325 = vector.broadcast %c3_i32 : i32 to vector<8x128xi32>
    %326 = arith.cmpi eq, %306, %325 : vector<8x128xi32>
    %cst_102 = arith.constant 0.000000e+00 : f32
    %327 = vector.broadcast %cst_102 : f32 to vector<8x128xf32>
    %328 = arith.select %326, %289, %327 : vector<8x128xi1>, vector<8x128xf32>
    %cst_103 = arith.constant dense<0.000000e+00> : vector<8xf32>
    %329 = vector.multi_reduction <add>, %328, %cst_103 [1] : vector<8x128xf32> to vector<8xf32>
    %330 = vector.shape_cast %329 : vector<8xf32> to vector<8x1xf32>
    %331 = tpu.concatenate %312, %318, %324, %330 in 1 : vector<8x1xf32>, vector<8x1xf32>, vector<8x1xf32>, vector<8x1xf32> -> vector<8x4xf32>
    %cst_104 = arith.constant dense<0xFF800000> : vector<8xf32>
    %332 = vector.multi_reduction <maximumf>, %331, %cst_104 [1] : vector<8x4xf32> to vector<8xf32>
    %333 = vector.shape_cast %332 : vector<8xf32> to vector<8x1xf32>
    %334 = vector.broadcast %333 : vector<8x1xf32> to vector<8x4xf32>
    %335 = arith.subf %331, %334 : vector<8x4xf32>
    %336 = math.exp %335 : vector<8x4xf32>
    %cst_105 = arith.constant dense<0.000000e+00> : vector<8xf32>
    %337 = vector.multi_reduction <add>, %336, %cst_105 [1] : vector<8x4xf32> to vector<8xf32>
    %338 = vector.shape_cast %337 : vector<8xf32> to vector<8x1xf32>
    %339 = vector.broadcast %338 : vector<8x1xf32> to vector<8x4xf32>
    %340 = arith.divf %336, %339 : vector<8x4xf32>
    %cst_106 = arith.constant 0.000000e+00 : f32
    %341 = vector.broadcast %cst_106 : f32 to vector<8x256xf32>
    %c0_107 = arith.constant 0 : index
    %c0_108 = arith.constant 0 : index
    %342 = vector.load %arg11[%c0_107, %c0_108] : memref<8x256xf32, #tpu.memory_space<vmem>>, vector<8x256xf32>
    tpu.vector_store %arg11[%c0_107, %c0_108], %341 {strides = array<i32>} : memref<8x256xf32, #tpu.memory_space<vmem>>, vector<8x256xf32>,
    %343 = tpu.concatenate %252, %104, %280, %105 in 1 : vector<8x32xf32>, vector<8x32xf32>, vector<8x32xf32>, vector<8x32xf32> -> vector<8x128xf32>
    %c0_109 = arith.constant 0 : index
    %c0_110 = arith.constant 0 : index
    %344 = vector.load %arg11[%c0_109, %c0_110] : memref<8x256xf32, #tpu.memory_space<vmem>>, vector<8x128xf32>
    tpu.vector_store %arg11[%c0_109, %c0_110], %343 {strides = array<i32>} : memref<8x256xf32, #tpu.memory_space<vmem>>, vector<8x128xf32>,
    %345 = tpu.concatenate %340, %244, %272, %288 in 1 : vector<8x4xf32>, vector<8x1xf32>, vector<8x1xf32>, vector<8x1xf32> -> vector<8x7xf32>
    %c0_111 = arith.constant 0 : index
    %c128 = arith.constant 128 : index
    %346 = vector.load %arg11[%c0_111, %c128] : memref<8x256xf32, #tpu.memory_space<vmem>>, vector<8x7xf32>
    tpu.vector_store %arg11[%c0_111, %c128], %345 {strides = array<i32>} : memref<8x256xf32, #tpu.memory_space<vmem>>, vector<8x7xf32>,
    %c0_112 = arith.constant 0 : index
    %c0_113 = arith.constant 0 : index
    %347 = vector.load %arg12[%c0_112, %c0_113] : memref<8x256xf32, #tpu.memory_space<vmem>>, vector<8x128xf32>
    tpu.vector_store %arg12[%c0_112, %c0_113], %185 {strides = array<i32>} : memref<8x256xf32, #tpu.memory_space<vmem>>, vector<8x128xf32>,
    %c0_114 = arith.constant 0 : index
    %c128_115 = arith.constant 128 : index
    %348 = vector.load %arg12[%c0_114, %c128_115] : memref<8x256xf32, #tpu.memory_space<vmem>>, vector<8x128xf32>
    tpu.vector_store %arg12[%c0_114, %c128_115], %187 {strides = array<i32>} : memref<8x256xf32, #tpu.memory_space<vmem>>, vector<8x128xf32>,
    %349 = tpu.concatenate %229, %231 in 1 : vector<8x64xf32>, vector<8x64xf32> -> vector<8x128xf32>
    %c0_116 = arith.constant 0 : index
    %c0_117 = arith.constant 0 : index
    %350 = vector.load %arg13[%c0_116, %c0_117] : memref<8x128xf32, #tpu.memory_space<vmem>>, vector<8x128xf32>
    tpu.vector_store %arg13[%c0_116, %c0_117], %349 {strides = array<i32>} : memref<8x128xf32, #tpu.memory_space<vmem>>, vector<8x128xf32>,
    %c0_118 = arith.constant 0 : index
    %c0_119 = arith.constant 0 : index
    %351 = vector.load %arg14[%c0_118, %c0_119] : memref<8x256xf32, #tpu.memory_space<vmem>>, vector<8x128xf32>
    tpu.vector_store %arg14[%c0_118, %c0_119], %139 {strides = array<i32>} : memref<8x256xf32, #tpu.memory_space<vmem>>, vector<8x128xf32>,
    %c0_120 = arith.constant 0 : index
    %c128_121 = arith.constant 128 : index
    %352 = vector.load %arg14[%c0_120, %c128_121] : memref<8x256xf32, #tpu.memory_space<vmem>>, vector<8x128xf32>
    tpu.vector_store %arg14[%c0_120, %c128_121], %137 {strides = array<i32>} : memref<8x256xf32, #tpu.memory_space<vmem>>, vector<8x128xf32>,
    return
  }
}

</mosaic_0001>

<llo_original>
// kernel: _fused_forward_impl.1
$region0: #{_fused_forward_impl.1}
  #allocation0 [shape = 'u32[]', space=smem, size = 0x4, offset = 0x4, fixed_abs, tag = 'smem constant byte address 0x4 - core index']
  #allocation1 [shape = 'u32[72,128]{1,0:T(1,128)}', space=vmem, size = 0x9000, scoped, tag = 'internal scratch']
  %s0 = inlined_call_operand.vmem [shape: s32[2], index: 0, kind: input, shape index: {}]
  %s1 = inlined_call_operand.vmem [shape: f32[8,48], index: 1, kind: input, shape index: {}]
  %s2 = inlined_call_operand.vmem [shape: f32[8,1], index: 2, kind: input, shape index: {}]
  %s3 = inlined_call_operand.vmem [shape: f32[8,256], index: 3, kind: input, shape index: {}, may-alias: {3,12}]
  %s4 = inlined_call_operand.vmem [shape: f32[8,128], index: 4, kind: input, shape index: {}, may-alias: {4,13}]
  %s5 = inlined_call_operand.vmem [shape: f32[8,256], index: 5, kind: input, shape index: {}, may-alias: {5,14}]
  %s6 = inlined_call_operand.vmem [shape: f32[8,32], index: 6, kind: input, shape index: {}]
  %s7 = inlined_call_operand.vmem [shape: f32[8,32], index: 7, kind: input, shape index: {}]
  %s8 = inlined_call_operand.vmem [shape: f32[8,32], index: 8, kind: input, shape index: {}]
  %s9 = inlined_call_operand.hbm [shape: bf16[256,1792], index: 9, kind: input, shape index: {}]
  %s10 = inlined_call_operand.vmem [shape: f32[1,1920], index: 10, kind: input, shape index: {}]
  %s11 = inlined_call_operand.vmem [shape: f32[8,256], index: 11, kind: output, shape index: {0}]
  %s12 = inlined_call_operand.vmem [shape: f32[8,256], index: 12, kind: output, shape index: {1}, may-alias: {3,12}]
  %s13 = inlined_call_operand.vmem [shape: f32[8,128], index: 13, kind: output, shape index: {2}, may-alias: {4,13}]
  %s14 = inlined_call_operand.vmem [shape: f32[8,256], index: 14, kind: output, shape index: {3}, may-alias: {5,14}]
  %15 = xla_tuple %s11, %s12, %s13, %s14
  %s16 = sld [smem:[#allocation0]]
  $region86: #{_fused_forward_impl.1} parent=0
    _
  %s18 = ssub.s32 1, %s16
  %s19 = scalar_select 0, %s18, %s16
  $region1: #{_fused_forward_impl.1} parent=0
    #allocation2 [shape = 'u8[512]{0}', space=smem, size = 0x200, scoped, tag = 'input window, operand 0, single buffered']
    #allocation3 [shape = 's32[1]{0}', space=sflag, size = 0x4, scoped, tag = 'scoped memory for _fused_forward_impl.1']
    #allocation4 [shape = 's32[1]{0}', space=sflag, size = 0x4, scoped, tag = 'scoped memory for _fused_forward_impl.1']
    #allocation5 [shape = 'u8[917504]{0}', space=vmem, size = 0xe0000, scoped, tag = 'input window, operand 9, single buffered']
    %20 = vsyncpa [#allocation4], 0
    %21 = vsyncpa [#allocation3], 0
    // Predicated region
    $region2: #{_fused_forward_impl.1} parent=1 // pred_check
      _
    $region3: #{_fused_forward_impl.1} parent=1 // pred_check_branch
      %23 = sbr.rel (0) target = $region5
    $region4: #{_fused_forward_impl.1} parent=1 // pred_region
      %25 = vsyncadd [#allocation4], 0
      %s27 = sshll.u32 %s0, 4
      %s28 = int_to_ptr.vmem [resolvable:$true] %s27
      %30 = dma.vmem_to_smem %s28, 16, [#allocation2], [#allocation4]
    $region5: #{_fused_forward_impl.1} parent=1 // pred_fallthru
      _
    // Predicated region
    $region6: #{_fused_forward_impl.1} parent=1 // pred_check
      _
    $region7: #{_fused_forward_impl.1} parent=1 // pred_check_branch
      %32 = sbr.rel (0) target = $region9
    $region8: #{_fused_forward_impl.1} parent=1 // pred_region
      _
    $region9: #{_fused_forward_impl.1} parent=1 // pred_fallthru
      _
    // Predicated region
    $region10: #{_fused_forward_impl.1} parent=1 // pred_check
      _
    $region11: #{_fused_forward_impl.1} parent=1 // pred_check_branch
      %34 = sbr.rel (0) target = $region13
    $region12: #{_fused_forward_impl.1} parent=1 // pred_region
      _
    $region13: #{_fused_forward_impl.1} parent=1 // pred_fallthru
      _
    // Predicated region
    $region14: #{_fused_forward_impl.1} parent=1 // pred_check
      _
    $region15: #{_fused_forward_impl.1} parent=1 // pred_check_branch
      %36 = sbr.rel (0) target = $region17
    $region16: #{_fused_forward_impl.1} parent=1 // pred_region
      _
    $region17: #{_fused_forward_impl.1} parent=1 // pred_fallthru
      _
    // Predicated region
    $region18: #{_fused_forward_impl.1} parent=1 // pred_check
      _
    $region19: #{_fused_forward_impl.1} parent=1 // pred_check_branch
      %38 = sbr.rel (0) target = $region21
    $region20: #{_fused_forward_impl.1} parent=1 // pred_region
      _
    $region21: #{_fused_forward_impl.1} parent=1 // pred_fallthru
      _
    // Predicated region
    $region22: #{_fused_forward_impl.1} parent=1 // pred_check
      _
    $region23: #{_fused_forward_impl.1} parent=1 // pred_check_branch
      %40 = sbr.rel (0) target = $region25
    $region24: #{_fused_forward_impl.1} parent=1 // pred_region
      _
    $region25: #{_fused_forward_impl.1} parent=1 // pred_fallthru
      _
    // Predicated region
    $region26: #{_fused_forward_impl.1} parent=1 // pred_check
      _
    $region27: #{_fused_forward_impl.1} parent=1 // pred_check_branch
      %42 = sbr.rel (0) target = $region29
    $region28: #{_fused_forward_impl.1} parent=1 // pred_region
      _
    $region29: #{_fused_forward_impl.1} parent=1 // pred_fallthru
      _
    // Predicated region
    $region30: #{_fused_forward_impl.1} parent=1 // pred_check
      _
    $region31: #{_fused_forward_impl.1} parent=1 // pred_check_branch
      %44 = sbr.rel (0) target = $region33
    $region32: #{_fused_forward_impl.1} parent=1 // pred_region
      _
    $region33: #{_fused_forward_impl.1} parent=1 // pred_fallthru
      _
    // Predicated region
    $region34: #{_fused_forward_impl.1} parent=1 // pred_check
      _
    $region35: #{_fused_forward_impl.1} parent=1 // pred_check_branch
      %46 = sbr.rel (0) target = $region37
    $region36: #{_fused_forward_impl.1} parent=1 // pred_region
      _
    $region37: #{_fused_forward_impl.1} parent=1 // pred_fallthru
      _
    // Predicated region
    $region38: #{_fused_forward_impl.1} parent=1 // pred_check
      _
    $region39: #{_fused_forward_impl.1} parent=1 // pred_check_branch
      %48 = sbr.rel (0) target = $region41
    $region40: #{_fused_forward_impl.1} parent=1 // pred_region
      %50 = vsyncadd [#allocation3], 0
      %s51 = sshll.u32 %s9, 4
      %s52 = int_to_ptr.hbm [resolvable:$true] %s51
      %s53 = sshll.u32 [#allocation5], 4
      %s54 = int_to_ptr.vmem [resolvable:$true] %s53
      %59 = dma.hbm_to_vmem [thread:$0]  %s52, 28672, %s54, [#allocation3], 896, 896, 56
    $region41: #{_fused_forward_impl.1} parent=1 // pred_fallthru
      _
    // Predicated region
    $region42: #{_fused_forward_impl.1} parent=1 // pred_check
      _
    $region43: #{_fused_forward_impl.1} parent=1 // pred_check_branch
      %61 = sbr.rel (0) target = $region45
    $region44: #{_fused_forward_impl.1} parent=1 // pred_region
      _
    $region45: #{_fused_forward_impl.1} parent=1 // pred_fallthru
      _
    // Predicated region
    $region46: #{_fused_forward_impl.1} parent=1 // pred_check
      _
    $region47: #{_fused_forward_impl.1} parent=1 // pred_check_branch
      %63 = sbr.rel (0) target = $region49
    $region48: #{_fused_forward_impl.1} parent=1 // pred_region
      %65 = dma.done [#allocation4], 16
    $region49: #{_fused_forward_impl.1} parent=1 // pred_fallthru
      _
    // Predicated region
    $region50: #{_fused_forward_impl.1} parent=1 // pred_check
      _
    $region51: #{_fused_forward_impl.1} parent=1 // pred_check_branch
      %67 = sbr.rel (0) target = $region53
    $region52: #{_fused_forward_impl.1} parent=1 // pred_region
      %69 = dma.done [#allocation3], 28672
    $region53: #{_fused_forward_impl.1} parent=1 // pred_fallthru
      _
    %70 = sfence
    %s72 = sld [smem:[#allocation2]]
    %s73 = sld [smem:[#allocation2 + $0x1]]
    %v74 = vld [vmem:[%s2] sm:$0xff]
    %v75 = vld [vmem:[%s6] sm:$0xff]
    %v76 = vld [vmem:[%s7] sm:$0xff]
    %v77 = vadd.f32 %v75, %v76
    %v78 = vld [vmem:[%s8] sm:$0xff]
    %v79 = vadd.f32 %v77, %v78
    %v80 = vld [vmem:[%s3] sm:$0xff]
    %v81 = vld [vmem:[%s3 + $0x8] sm:$0xff]
    %v82 = vld [vmem:[%s4] sm:$0xff]
    %v83 = vld [vmem:[%s5] sm:$0xff]
    %v84 = vld [vmem:[%s5 + $0x8] sm:$0xff]
    %86 = vset.pattern.permute.xlu0 0
    %87 = vperm.xlu0 %86, %v74
    %v88 = vpop.permute.xlu0 %87
    %v90 = vmul.f32 %v80, %v88
    %v91 = vmul.f32 %v81, %v88
    %v92 = vmul.f32 %v82, %v88
    %v93 = vmul.f32 %v83, %v88
    %v94 = vmul.f32 %v84, %v88
    %v95 = vlaneseq
    %v96 = vand.u32 %v95, 127
    %s97 = smul.u32 %s72, 32
    %v98 = vstv %s97
    %vm99 = vcmp.ge.s32.totalorder %v96, %v98
    %s100 = sadd.s32 %s97, 32
    %v101 = vstv %s100
    %vm102 = vcmp.lt.s32.totalorder %v96, %v101
    %vm103 = vmand %vm99, %vm102
    %v104 = vsel %vm103, %v90, 0.0
    %v105 = vsel %vm103, %v91, 0.0
    %107 = vrot.lane.b32.xlu0 %v104, 96
    %v108 = vpop.permute.xlu0 %107
    %v110 = vadd.f32 %v104, %v108
    %112 = vrot.lane.b32.xlu0 %v105, 96
    %v113 = vpop.permute.xlu0 %112
    %v115 = vadd.f32 %v105, %v113
    %116 = vrot.lane.b32.xlu0 %v104, 64
    %v117 = vpop.permute.xlu0 %116
    %v119 = vadd.f32 %v110, %v117
    %120 = vrot.lane.b32.xlu0 %v105, 64
    %v121 = vpop.permute.xlu0 %120
    %v123 = vadd.f32 %v115, %v121
    %124 = vrot.lane.b32.xlu0 %v104, 32
    %v125 = vpop.permute.xlu0 %124
    %v127 = vadd.f32 %v119, %v125
    %128 = vrot.lane.b32.xlu0 %v105, 32
    %v129 = vpop.permute.xlu0 %128
    %v131 = vadd.f32 %v123, %v129
    %s132 = smul.u32 %s73, 32
    %v133 = vstv %s132
    %vm134 = vcmp.ge.s32.totalorder %v96, %v133
    %s135 = sadd.s32 %s132, 32
    %v136 = vstv %s135
    %vm137 = vcmp.lt.s32.totalorder %v96, %v136
    %vm138 = vmand %vm134, %vm137
    %v139 = vsel %vm138, %v92, 0.0
    %141 = vrot.lane.b32.xlu0 %v92, 64
    %v142 = vpop.permute.xlu0 %141
    %v144 = vsel %vm138, %v142, 0.0
    %146 = vrot.lane.b32.xlu0 %v139, 96
    %v147 = vpop.permute.xlu0 %146
    %v149 = vadd.f32 %v139, %v147
    %151 = vrot.lane.b32.xlu0 %v144, 96
    %v152 = vpop.permute.xlu0 %151
    %v154 = vadd.f32 %v144, %v152
    %v155 = vld [vmem:[%s1] sm:$0xff]
    %v156 = vld [vmem:[#allocation5] sm:$0xff]
    %v157 = vld [vmem:[#allocation5 + $0x38] sm:$0xff]
    %v158 = vld [vmem:[#allocation5 + $0x70] sm:$0xff]
    %v159 = vld [vmem:[#allocation5 + $0xa8] sm:$0xff]
    %v160 = vld [vmem:[#allocation5 + $0xe0] sm:$0xff]
    %v161 = vld [vmem:[#allocation5 + $0x118] sm:$0xff]
    %v162 = vpack.c.bf16 %v155, %v155
    %v163 = vld [vmem:[%s10] sm:$0x3]
    %v165 = vperm.slane %v163, 0
    %v166 = vperm.slane %v163, 1
    %v175 = vunpack.c.l.b16 %v156
    %v176 = vunpack.c.h.b16 %v156
    %v177 = vunpack.c.l.b16 %v157
    %v178 = vunpack.c.h.b16 %v157
    %v179 = vunpack.c.l.b16 %v158
    %v180 = vunpack.c.h.b16 %v158
    %v181 = vunpack.c.l.b16 %v159
    %v182 = vunpack.c.h.b16 %v159
    %v183 = vunpack.c.l.b16 %v160
    %v184 = vunpack.c.h.b16 %v160
    %v185 = vunpack.c.l.b16 %v161
    %v186 = vunpack.c.h.b16 %v161
    %v187 = vpack.c.b16 %v177, %v175
    %v188 = vpack.c.b16 %v178, %v176
    %v189 = vpack.c.b16 %v181, %v179
    %v190 = vpack.c.b16 %v182, %v180
    %v191 = vpack.c.b16 %v185, %v183
    %v192 = vpack.c.b16 %v186, %v184
    %vm199 = vcmask 392192
    %v201 = vsel %vm199, %v162, 0
    %203 = vmatpush.bf16.msra.mxu0 0
    %204 = vmatpush.bf16.msra.mxu0 0
    %205 = vmatpush.bf16.msra.mxu0 0
    %206 = vmatpush.bf16.msra.mxu0 0
    %207 = vmatpush.bf16.msra.mxu0 0
    %208 = vmatpush.bf16.msra.mxu0 %v191
    %209 = vmatpush.bf16.msra.mxu0 %v189
    %210 = vmatpush.bf16.msra.mxu0 %v187
    %211 = vmatmul.bf16.gmra.mxu0 %v201
    %v212 = vpop.f32.mrf.mxu0
    %v213 = vadd.f32 %v165, %v212
    %v214 = vpop.f32.mrf.mxu0
    %215 = vdwg.mxu0
    %216 = vmatpush.bf16.msra.mxu0 0
    %217 = vmatpush.bf16.msra.mxu0 0
    %218 = vmatpush.bf16.msra.mxu0 0
    %219 = vmatpush.bf16.msra.mxu0 0
    %220 = vmatpush.bf16.msra.mxu0 0
    %221 = vmatpush.bf16.msra.mxu0 %v192
    %222 = vmatpush.bf16.msra.mxu0 %v190
    %223 = vmatpush.bf16.msra.mxu0 %v188
    %224 = vmatmul.bf16.gmra.mxu0 %v201
    %v225 = vpop.f32.mrf.mxu0
    %v226 = vadd.f32 %v166, %v225
    %v227 = vpop.f32.mrf.mxu0
    %228 = vdwg.mxu0
    %v229 = vmax.f32 %v213, 0.0
    %v230 = vmax.f32 %v226, 0.0
    %v231 = vld [vmem:[#allocation5 + $0x8] sm:$0xf]
    %v232 = vld [vmem:[#allocation5 + $0x40] sm:$0xf]
    %v233 = vld [vmem:[#allocation5 + $0x78] sm:$0xf]
    %v234 = vld [vmem:[#allocation5 + $0xb0] sm:$0xf]
    %v235 = vld [vmem:[#allocation5 + $0xe8] sm:$0xf]
    %v236 = vld [vmem:[#allocation5 + $0x120] sm:$0xf]
    %v237 = vld [vmem:[#allocation5 + $0x158] sm:$0xf]
    %v238 = vld [vmem:[#allocation5 + $0x190] sm:$0xf]
    %v239 = vld [vmem:[#allocation5 + $0x1c8] sm:$0xf]
    %v240 = vld [vmem:[#allocation5 + $0x200] sm:$0xf]
    %v241 = vld [vmem:[#allocation5 + $0x238] sm:$0xf]
    %v242 = vld [vmem:[#allocation5 + $0x270] sm:$0xf]
    %v243 = vld [vmem:[#allocation5 + $0x2a8] sm:$0xf]
    %v244 = vld [vmem:[#allocation5 + $0x2e0] sm:$0xf]
    %v245 = vld [vmem:[#allocation5 + $0x318] sm:$0xf]
    %v246 = vld [vmem:[#allocation5 + $0x350] sm:$0xf]
    %v247 = vld [vmem:[#allocation5 + $0x388] sm:$0xf]
    %v248 = vld [vmem:[#allocation5 + $0x3c0] sm:$0xf]
    %v249 = vld [vmem:[#allocation5 + $0x3f8] sm:$0xf]
    %v250 = vld [vmem:[#allocation5 + $0x430] sm:$0xf]
    %v251 = vld [vmem:[#allocation5 + $0x468] sm:$0xf]
    %v252 = vld [vmem:[#allocation5 + $0x4a0] sm:$0xf]
    %v253 = vld [vmem:[#allocation5 + $0x4d8] sm:$0xf]
    %v254 = vld [vmem:[#allocation5 + $0x510] sm:$0xf]
    %v255 = vld [vmem:[#allocation5 + $0x548] sm:$0xf]
    %v256 = vld [vmem:[#allocation5 + $0x580] sm:$0xf]
    %v257 = vld [vmem:[#allocation5 + $0x5b8] sm:$0xf]
    %v258 = vld [vmem:[#allocation5 + $0x5f0] sm:$0xf]
    %v259 = vld [vmem:[#allocation5 + $0x628] sm:$0xf]
    %v260 = vld [vmem:[#allocation5 + $0x660] sm:$0xf]
    %v261 = vld [vmem:[#allocation5 + $0x698] sm:$0xf]
    %v262 = vld [vmem:[#allocation5 + $0x6d0] sm:$0xf]
    %v263 = vpack.c.bf16 %v229, %v229
    %v264 = vpack.c.bf16 %v230, %v230
    %v265 = vld [vmem:[%s10 + $0x2] sm:$0x1]
    %v267 = vperm.slane %v265, 0
    %v301 = vunpack.c.l.b16 %v231
    %v302 = vunpack.c.l.b16 %v232
    %v303 = vunpack.c.l.b16 %v233
    %v304 = vunpack.c.l.b16 %v234
    %v305 = vunpack.c.l.b16 %v235
    %v306 = vunpack.c.l.b16 %v236
    %v307 = vunpack.c.l.b16 %v237
    %v308 = vunpack.c.l.b16 %v238
    %v309 = vunpack.c.l.b16 %v239
    %v310 = vunpack.c.l.b16 %v240
    %v311 = vunpack.c.l.b16 %v241
    %v312 = vunpack.c.l.b16 %v242
    %v313 = vunpack.c.l.b16 %v243
    %v314 = vunpack.c.l.b16 %v244
    %v315 = vunpack.c.l.b16 %v245
    %v316 = vunpack.c.l.b16 %v246
    %v317 = vunpack.c.l.b16 %v247
    %v318 = vunpack.c.l.b16 %v248
    %v319 = vunpack.c.l.b16 %v249
    %v320 = vunpack.c.l.b16 %v250
    %v321 = vunpack.c.l.b16 %v251
    %v322 = vunpack.c.l.b16 %v252
    %v323 = vunpack.c.l.b16 %v253
    %v324 = vunpack.c.l.b16 %v254
    %v325 = vunpack.c.l.b16 %v255
    %v326 = vunpack.c.l.b16 %v256
    %v327 = vunpack.c.l.b16 %v257
    %v328 = vunpack.c.l.b16 %v258
    %v329 = vunpack.c.l.b16 %v259
    %v330 = vunpack.c.l.b16 %v260
    %v331 = vunpack.c.l.b16 %v261
    %v332 = vunpack.c.l.b16 %v262
    %v333 = vpack.c.b16 %v302, %v301
    %v334 = vpack.c.b16 %v304, %v303
    %v335 = vpack.c.b16 %v306, %v305
    %v336 = vpack.c.b16 %v308, %v307
    %v337 = vpack.c.b16 %v310, %v309
    %v338 = vpack.c.b16 %v312, %v311
    %v339 = vpack.c.b16 %v314, %v313
    %v340 = vpack.c.b16 %v316, %v315
    %v341 = vpack.c.b16 %v318, %v317
    %v342 = vpack.c.b16 %v320, %v319
    %v343 = vpack.c.b16 %v322, %v321
    %v344 = vpack.c.b16 %v324, %v323
    %v345 = vpack.c.b16 %v326, %v325
    %v346 = vpack.c.b16 %v328, %v327
    %v347 = vpack.c.b16 %v330, %v329
    %v348 = vpack.c.b16 %v332, %v331
    %365 = vmatpush.bf16.msra.mxu0 %v340
    %366 = vmatpush.bf16.msra.mxu0 %v339
    %367 = vmatpush.bf16.msra.mxu0 %v338
    %368 = vmatpush.bf16.msra.mxu0 %v337
    %369 = vmatpush.bf16.msra.mxu0 %v336
    %370 = vmatpush.bf16.msra.mxu0 %v335
    %371 = vmatpush.bf16.msra.mxu0 %v334
    %372 = vmatpush.bf16.msra.mxu0 %v333
    %373 = vmatmul.bf16.gmra.mxu0 %v263
    %v374 = vpop.f32.mrf.mxu0
    %v375 = vadd.f32 %v267, %v374
    %v376 = vpop.f32.mrf.mxu0
    %377 = vdwg.mxu0
    %378 = vmatpush.bf16.msra.mxu0 %v348
    %379 = vmatpush.bf16.msra.mxu0 %v347
    %380 = vmatpush.bf16.msra.mxu0 %v346
    %381 = vmatpush.bf16.msra.mxu0 %v345
    %382 = vmatpush.bf16.msra.mxu0 %v344
    %383 = vmatpush.bf16.msra.mxu0 %v343
    %384 = vmatpush.bf16.msra.mxu0 %v342
    %385 = vmatpush.bf16.msra.mxu0 %v341
    %386 = vmatmul.bf16.gmra.mxu0 %v264
    %v387 = vpop.f32.mrf.mxu0
    %v388 = vadd.f32 %v375, %v387
    %v389 = vpop.f32.mrf.mxu0
    %390 = vdwg.mxu0
    %v391 = vmax.f32 %v388, 0.0
    %393 = vrot.lane.b32.xlu0 %v93, 32
    %v394 = vpop.permute.xlu0 %393
    %397 = vrot.lane.b32.xlu0 %v127, 32
    %v398 = vpop.permute.xlu0 %397
    %401 = vrot.lane.b32.xlu0 %v149, 64
    %v402 = vpop.permute.xlu0 %401
    %405 = vrot.lane.b32.xlu0 %v79, 96
    %v406 = vpop.permute.xlu0 %405
    %vm408 = vcmask 261120
    %v409 = vsel %vm408, %v391, %v394
    %v410 = vsel %vm408, %v394, %v398
    %vm411 = vcmask 523264
    %v412 = vsel %vm411, %v410, %v402
    %vm413 = vcmask 785408
    %v414 = vsel %vm413, %v412, %v406
    %v415 = vld [vmem:[#allocation5 + $0xc] sm:$0xff]
    %v416 = vld [vmem:[#allocation5 + $0x14] sm:$0xff]
    %v417 = vld [vmem:[#allocation5 + $0x1c] sm:$0xff]
    %v418 = vld [vmem:[#allocation5 + $0x24] sm:$0xff]
    %v419 = vld [vmem:[#allocation5 + $0x44] sm:$0xff]
    %v420 = vld [vmem:[#allocation5 + $0x4c] sm:$0xff]
    %v421 = vld [vmem:[#allocation5 + $0x54] sm:$0xff]
    %v422 = vld [vmem:[#allocation5 + $0x5c] sm:$0xff]
    %v423 = vld [vmem:[#allocation5 + $0x7c] sm:$0xff]
    %v424 = vld [vmem:[#allocation5 + $0x84] sm:$0xff]
    %v425 = vld [vmem:[#allocation5 + $0x8c] sm:$0xff]
    %v426 = vld [vmem:[#allocation5 + $0x94] sm:$0xff]
    %v427 = vld [vmem:[#allocation5 + $0xb4] sm:$0xff]
    %v428 = vld [vmem:[#allocation5 + $0xbc] sm:$0xff]
    %v429 = vld [vmem:[#allocation5 + $0xc4] sm:$0xff]
    %v430 = vld [vmem:[#allocation5 + $0xcc] sm:$0xff]
    %v431 = vld [vmem:[#allocation5 + $0xec] sm:$0xff]
    %v432 = vld [vmem:[#allocation5 + $0xf4] sm:$0xff]
    %v433 = vld [vmem:[#allocation5 + $0xfc] sm:$0xff]
    %v434 = vld [vmem:[#allocation5 + $0x104] sm:$0xff]
    %v435 = vld [vmem:[#allocation5 + $0x124] sm:$0xff]
    %v436 = vld [vmem:[#allocation5 + $0x12c] sm:$0xff]
    %v437 = vld [vmem:[#allocation5 + $0x134] sm:$0xff]
    %v438 = vld [vmem:[#allocation5 + $0x13c] sm:$0xff]
    %v439 = vld [vmem:[#allocation5 + $0x15c] sm:$0xff]
    %v440 = vld [vmem:[#allocation5 + $0x164] sm:$0xff]
    %v441 = vld [vmem:[#allocation5 + $0x16c] sm:$0xff]
    %v442 = vld [vmem:[#allocation5 + $0x174] sm:$0xff]
    %v443 = vld [vmem:[#allocation5 + $0x194] sm:$0xff]
    %v444 = vld [vmem:[#allocation5 + $0x19c] sm:$0xff]
    %v445 = vld [vmem:[#allocation5 + $0x1a4] sm:$0xff]
    %v446 = vld [vmem:[#allocation5 + $0x1ac] sm:$0xff]
    %v447 = vld [vmem:[#allocation5 + $0x1cc] sm:$0xff]
    %v448 = vld [vmem:[#allocation5 + $0x1d4] sm:$0xff]
    %v449 = vld [vmem:[#allocation5 + $0x1dc] sm:$0xff]
    %v450 = vld [vmem:[#allocation5 + $0x1e4] sm:$0xff]
    %v451 = vld [vmem:[#allocation5 + $0x204] sm:$0xff]
    %v452 = vld [vmem:[#allocation5 + $0x20c] sm:$0xff]
    %v453 = vld [vmem:[#allocation5 + $0x214] sm:$0xff]
    %v454 = vld [vmem:[#allocation5 + $0x21c] sm:$0xff]
    %v455 = vld [vmem:[#allocation5 + $0x23c] sm:$0xff]
    %v456 = vld [vmem:[#allocation5 + $0x244] sm:$0xff]
    %v457 = vld [vmem:[#allocation5 + $0x24c] sm:$0xff]
    %v458 = vld [vmem:[#allocation5 + $0x254] sm:$0xff]
    %v459 = vld [vmem:[#allocation5 + $0x274] sm:$0xff]
    %v460 = vld [vmem:[#allocation5 + $0x27c] sm:$0xff]
    %v461 = vld [vmem:[#allocation5 + $0x284] sm:$0xff]
    %v462 = vld [vmem:[#allocation5 + $0x28c] sm:$0xff]
    %v463 = vld [vmem:[#allocation5 + $0x2ac] sm:$0xff]
    %v464 = vld [vmem:[#allocation5 + $0x2b4] sm:$0xff]
    %v465 = vld [vmem:[#allocation5 + $0x2bc] sm:$0xff]
    %v466 = vld [vmem:[#allocation5 + $0x2c4] sm:$0xff]
    %v467 = vld [vmem:[#allocation5 + $0x2e4] sm:$0xff]
    %v468 = vld [vmem:[#allocation5 + $0x2ec] sm:$0xff]
    %v469 = vld [vmem:[#allocation5 + $0x2f4] sm:$0xff]
    %v470 = vld [vmem:[#allocation5 + $0x2fc] sm:$0xff]
    %v471 = vld [vmem:[#allocation5 + $0x31c] sm:$0xff]
    %v472 = vld [vmem:[#allocation5 + $0x324] sm:$0xff]
    %v473 = vld [vmem:[#allocation5 + $0x32c] sm:$0xff]
    %v474 = vld [vmem:[#allocation5 + $0x334] sm:$0xff]
    %v475 = vld [vmem:[#allocation5 + $0x354] sm:$0xff]
    %v476 = vld [vmem:[#allocation5 + $0x35c] sm:$0xff]
    %v477 = vld [vmem:[#allocation5 + $0x364] sm:$0xff]
    %v478 = vld [vmem:[#allocation5 + $0x36c] sm:$0xff]
    %v479 = vld [vmem:[#allocation5 + $0x38c] sm:$0xff]
    %v480 = vld [vmem:[#allocation5 + $0x394] sm:$0xff]
    %v481 = vld [vmem:[#allocation5 + $0x39c] sm:$0xff]
    %v482 = vld [vmem:[#allocation5 + $0x3a4] sm:$0xff]
    %v483 = vld [vmem:[#allocation5 + $0x3c4] sm:$0xff]
    %v484 = vld [vmem:[#allocation5 + $0x3cc] sm:$0xff]
    %v485 = vld [vmem:[#allocation5 + $0x3d4] sm:$0xff]
    %v486 = vld [vmem:[#allocation5 + $0x3dc] sm:$0xff]
    %v487 = vld [vmem:[#allocation5 + $0x3fc] sm:$0xff]
    %v488 = vld [vmem:[#allocation5 + $0x404] sm:$0xff]
    %v489 = vld [vmem:[#allocation5 + $0x40c] sm:$0xff]
    %v490 = vld [vmem:[#allocation5 + $0x414] sm:$0xff]
    %v491 = vld [vmem:[#allocation5 + $0x434] sm:$0xff]
    %v492 = vld [vmem:[#allocation5 + $0x43c] sm:$0xff]
    %v493 = vld [vmem:[#allocation5 + $0x444] sm:$0xff]
    %v494 = vld [vmem:[#allocation5 + $0x44c] sm:$0xff]
    %v495 = vld [vmem:[#allocation5 + $0x46c] sm:$0xff]
    %v496 = vld [vmem:[#allocation5 + $0x474] sm:$0xff]
    %v497 = vld [vmem:[#allocation5 + $0x47c] sm:$0xff]
    %v498 = vld [vmem:[#allocation5 + $0x484] sm:$0xff]
    %v499 = vld [vmem:[#allocation5 + $0x4a4] sm:$0xff]
    %v500 = vld [vmem:[#allocation5 + $0x4ac] sm:$0xff]
    %v501 = vld [vmem:[#allocation5 + $0x4b4] sm:$0xff]
    %v502 = vld [vmem:[#allocation5 + $0x4bc] sm:$0xff]
    %v503 = vld [vmem:[#allocation5 + $0x4dc] sm:$0xff]
    %v504 = vld [vmem:[#allocation5 + $0x4e4] sm:$0xff]
    %v505 = vld [vmem:[#allocation5 + $0x4ec] sm:$0xff]
    %v506 = vld [vmem:[#allocation5 + $0x4f4] sm:$0xff]
    %v507 = vld [vmem:[#allocation5 + $0x514] sm:$0xff]
    %v508 = vld [vmem:[#allocation5 + $0x51c] sm:$0xff]
    %v509 = vld [vmem:[#allocation5 + $0x524] sm:$0xff]
    %v510 = vld [vmem:[#allocation5 + $0x52c] sm:$0xff]
    %v511 = vld [vmem:[#allocation5 + $0x54c] sm:$0xff]
    %v512 = vld [vmem:[#allocation5 + $0x554] sm:$0xff]
    %v513 = vld [vmem:[#allocation5 + $0x55c] sm:$0xff]
    %v514 = vld [vmem:[#allocation5 + $0x564] sm:$0xff]
    %v515 = vld [vmem:[#allocation5 + $0x584] sm:$0xff]
    %v516 = vld [vmem:[#allocation5 + $0x58c] sm:$0xff]
    %v517 = vld [vmem:[#allocation5 + $0x594] sm:$0xff]
    %v518 = vld [vmem:[#allocation5 + $0x59c] sm:$0xff]
    %v519 = vld [vmem:[#allocation5 + $0x5bc] sm:$0xff]
    %v520 = vld [vmem:[#allocation5 + $0x5c4] sm:$0xff]
    %v521 = vld [vmem:[#allocation5 + $0x5cc] sm:$0xff]
    %v522 = vld [vmem:[#allocation5 + $0x5d4] sm:$0xff]
    %v523 = vld [vmem:[#allocation5 + $0x5f4] sm:$0xff]
    %v524 = vld [vmem:[#allocation5 + $0x5fc] sm:$0xff]
    %v525 = vld [vmem:[#allocation5 + $0x604] sm:$0xff]
    %v526 = vld [vmem:[#allocation5 + $0x60c] sm:$0xff]
    %v527 = vld [vmem:[#allocation5 + $0x62c] sm:$0xff]
    %v528 = vld [vmem:[#allocation5 + $0x634] sm:$0xff]
    %v529 = vld [vmem:[#allocation5 + $0x63c] sm:$0xff]
    %v530 = vld [vmem:[#allocation5 + $0x644] sm:$0xff]
    %v531 = vld [vmem:[#allocation5 + $0x664] sm:$0xff]
    %v532 = vld [vmem:[#allocation5 + $0x66c] sm:$0xff]
    %v533 = vld [vmem:[#allocation5 + $0x674] sm:$0xff]
    %v534 = vld [vmem:[#allocation5 + $0x67c] sm:$0xff]
    %v535 = vld [vmem:[#allocation5 + $0x69c] sm:$0xff]
    %v536 = vld [vmem:[#allocation5 + $0x6a4] sm:$0xff]
    %v537 = vld [vmem:[#allocation5 + $0x6ac] sm:$0xff]
    %v538 = vld [vmem:[#allocation5 + $0x6b4] sm:$0xff]
    %v539 = vld [vmem:[#allocation5 + $0x6d4] sm:$0xff]
    %v540 = vld [vmem:[#allocation5 + $0x6dc] sm:$0xff]
    %v541 = vld [vmem:[#allocation5 + $0x6e4] sm:$0xff]
    %v542 = vld [vmem:[#allocation5 + $0x6ec] sm:$0xff]
    %v543 = vpack.c.bf16 %v409, %v409
    %v544 = vpack.c.bf16 %v414, %v414
    %v673 = vunpack.c.l.b16 %v415
    %v674 = vunpack.c.h.b16 %v415
    %v675 = vunpack.c.l.b16 %v416
    %v676 = vunpack.c.h.b16 %v416
    %v677 = vunpack.c.l.b16 %v417
    %v678 = vunpack.c.h.b16 %v417
    %v679 = vunpack.c.l.b16 %v418
    %v680 = vunpack.c.h.b16 %v418
    %v681 = vunpack.c.l.b16 %v419
    %v682 = vunpack.c.h.b16 %v419
    %v683 = vunpack.c.l.b16 %v420
    %v684 = vunpack.c.h.b16 %v420
    %v685 = vunpack.c.l.b16 %v421
    %v686 = vunpack.c.h.b16 %v421
    %v687 = vunpack.c.l.b16 %v422
    %v688 = vunpack.c.h.b16 %v422
    %v689 = vunpack.c.l.b16 %v423
    %v690 = vunpack.c.h.b16 %v423
    %v691 = vunpack.c.l.b16 %v424
    %v692 = vunpack.c.h.b16 %v424
    %v693 = vunpack.c.l.b16 %v425
    %v694 = vunpack.c.h.b16 %v425
    %v695 = vunpack.c.l.b16 %v426
    %v696 = vunpack.c.h.b16 %v426
    %v697 = vunpack.c.l.b16 %v427
    %v698 = vunpack.c.h.b16 %v427
    %v699 = vunpack.c.l.b16 %v428
    %v700 = vunpack.c.h.b16 %v428
    %v701 = vunpack.c.l.b16 %v429
    %v702 = vunpack.c.h.b16 %v429
    %v703 = vunpack.c.l.b16 %v430
    %v704 = vunpack.c.h.b16 %v430
    %v705 = vunpack.c.l.b16 %v431
    %v706 = vunpack.c.h.b16 %v431
    %v707 = vunpack.c.l.b16 %v432
    %v708 = vunpack.c.h.b16 %v432
    %v709 = vunpack.c.l.b16 %v433
    %v710 = vunpack.c.h.b16 %v433
    %v711 = vunpack.c.l.b16 %v434
    %v712 = vunpack.c.h.b16 %v434
    %v713 = vunpack.c.l.b16 %v435
    %v714 = vunpack.c.h.b16 %v435
    %v715 = vunpack.c.l.b16 %v436
    %v716 = vunpack.c.h.b16 %v436
    %v717 = vunpack.c.l.b16 %v437
    %v718 = vunpack.c.h.b16 %v437
    %v719 = vunpack.c.l.b16 %v438
    %v720 = vunpack.c.h.b16 %v438
    %v721 = vunpack.c.l.b16 %v439
    %v722 = vunpack.c.h.b16 %v439
    %v723 = vunpack.c.l.b16 %v440
    %v724 = vunpack.c.h.b16 %v440
    %v725 = vunpack.c.l.b16 %v441
    %v726 = vunpack.c.h.b16 %v441
    %v727 = vunpack.c.l.b16 %v442
    %v728 = vunpack.c.h.b16 %v442
    %v729 = vunpack.c.l.b16 %v443
    %v730 = vunpack.c.h.b16 %v443
    %v731 = vunpack.c.l.b16 %v444
    %v732 = vunpack.c.h.b16 %v444
    %v733 = vunpack.c.l.b16 %v445
    %v734 = vunpack.c.h.b16 %v445
    %v735 = vunpack.c.l.b16 %v446
    %v736 = vunpack.c.h.b16 %v446
    %v737 = vunpack.c.l.b16 %v447
    %v738 = vunpack.c.h.b16 %v447
    %v739 = vunpack.c.l.b16 %v448
    %v740 = vunpack.c.h.b16 %v448
    %v741 = vunpack.c.l.b16 %v449
    %v742 = vunpack.c.h.b16 %v449
    %v743 = vunpack.c.l.b16 %v450
    %v744 = vunpack.c.h.b16 %v450
    %v745 = vunpack.c.l.b16 %v451
    %v746 = vunpack.c.h.b16 %v451
    %v747 = vunpack.c.l.b16 %v452
    %v748 = vunpack.c.h.b16 %v452
    %v749 = vunpack.c.l.b16 %v453
    %v750 = vunpack.c.h.b16 %v453
    %v751 = vunpack.c.l.b16 %v454
    %v752 = vunpack.c.h.b16 %v454
    %v753 = vunpack.c.l.b16 %v455
    %v754 = vunpack.c.h.b16 %v455
    %v755 = vunpack.c.l.b16 %v456
    %v756 = vunpack.c.h.b16 %v456
    %v757 = vunpack.c.l.b16 %v457
    %v758 = vunpack.c.h.b16 %v457
    %v759 = vunpack.c.l.b16 %v458
    %v760 = vunpack.c.h.b16 %v458
    %v761 = vunpack.c.l.b16 %v459
    %v762 = vunpack.c.h.b16 %v459
    %v763 = vunpack.c.l.b16 %v460
    %v764 = vunpack.c.h.b16 %v460
    %v765 = vunpack.c.l.b16 %v461
    %v766 = vunpack.c.h.b16 %v461
    %v767 = vunpack.c.l.b16 %v462
    %v768 = vunpack.c.h.b16 %v462
    %v769 = vunpack.c.l.b16 %v463
    %v770 = vunpack.c.h.b16 %v463
    %v771 = vunpack.c.l.b16 %v464
    %v772 = vunpack.c.h.b16 %v464
    %v773 = vunpack.c.l.b16 %v465
    %v774 = vunpack.c.h.b16 %v465
    %v775 = vunpack.c.l.b16 %v466
    %v776 = vunpack.c.h.b16 %v466
    %v777 = vunpack.c.l.b16 %v467
    %v778 = vunpack.c.h.b16 %v467
    %v779 = vunpack.c.l.b16 %v468
    %v780 = vunpack.c.h.b16 %v468
    %v781 = vunpack.c.l.b16 %v469
    %v782 = vunpack.c.h.b16 %v469
    %v783 = vunpack.c.l.b16 %v470
    %v784 = vunpack.c.h.b16 %v470
    %v785 = vunpack.c.l.b16 %v471
    %v786 = vunpack.c.h.b16 %v471
    %v787 = vunpack.c.l.b16 %v472
    %v788 = vunpack.c.h.b16 %v472
    %v789 = vunpack.c.l.b16 %v473
    %v790 = vunpack.c.h.b16 %v473
    %v791 = vunpack.c.l.b16 %v474
    %v792 = vunpack.c.h.b16 %v474
    %v793 = vunpack.c.l.b16 %v475
    %v794 = vunpack.c.h.b16 %v475
    %v795 = vunpack.c.l.b16 %v476
    %v796 = vunpack.c.h.b16 %v476
    %v797 = vunpack.c.l.b16 %v477
    %v798 = vunpack.c.h.b16 %v477
    %v799 = vunpack.c.l.b16 %v478
    %v800 = vunpack.c.h.b16 %v478
    %v801 = vunpack.c.l.b16 %v479
    %v802 = vunpack.c.h.b16 %v479
    %v803 = vunpack.c.l.b16 %v480
    %v804 = vunpack.c.h.b16 %v480
    %v805 = vunpack.c.l.b16 %v481
    %v806 = vunpack.c.h.b16 %v481
    %v807 = vunpack.c.l.b16 %v482
    %v808 = vunpack.c.h.b16 %v482
    %v809 = vunpack.c.l.b16 %v483
    %v810 = vunpack.c.h.b16 %v483
    %v811 = vunpack.c.l.b16 %v484
    %v812 = vunpack.c.h.b16 %v484
    %v813 = vunpack.c.l.b16 %v485
    %v814 = vunpack.c.h.b16 %v485
    %v815 = vunpack.c.l.b16 %v486
    %v816 = vunpack.c.h.b16 %v486
    %v817 = vunpack.c.l.b16 %v487
    %v818 = vunpack.c.h.b16 %v487
    %v819 = vunpack.c.l.b16 %v488
    %v820 = vunpack.c.h.b16 %v488
    %v821 = vunpack.c.l.b16 %v489
    %v822 = vunpack.c.h.b16 %v489
    %v823 = vunpack.c.l.b16 %v490
    %v824 = vunpack.c.h.b16 %v490
    %v825 = vunpack.c.l.b16 %v491
    %v826 = vunpack.c.h.b16 %v491
    %v827 = vunpack.c.l.b16 %v492
    %v828 = vunpack.c.h.b16 %v492
    %v829 = vunpack.c.l.b16 %v493
    %v830 = vunpack.c.h.b16 %v493
    %v831 = vunpack.c.l.b16 %v494
    %v832 = vunpack.c.h.b16 %v494
    %v833 = vunpack.c.l.b16 %v495
    %v834 = vunpack.c.h.b16 %v495
    %v835 = vunpack.c.l.b16 %v496
    %v836 = vunpack.c.h.b16 %v496
    %v837 = vunpack.c.l.b16 %v497
    %v838 = vunpack.c.h.b16 %v497
    %v839 = vunpack.c.l.b16 %v498
    %v840 = vunpack.c.h.b16 %v498
    %v841 = vunpack.c.l.b16 %v499
    %v842 = vunpack.c.h.b16 %v499
    %v843 = vunpack.c.l.b16 %v500
    %v844 = vunpack.c.h.b16 %v500
    %v845 = vunpack.c.l.b16 %v501
    %v846 = vunpack.c.h.b16 %v501
    %v847 = vunpack.c.l.b16 %v502
    %v848 = vunpack.c.h.b16 %v502
    %v849 = vunpack.c.l.b16 %v503
    %v850 = vunpack.c.h.b16 %v503
    %v851 = vunpack.c.l.b16 %v504
    %v852 = vunpack.c.h.b16 %v504
    %v853 = vunpack.c.l.b16 %v505
    %v854 = vunpack.c.h.b16 %v505
    %v855 = vunpack.c.l.b16 %v506
    %v856 = vunpack.c.h.b16 %v506
    %v857 = vunpack.c.l.b16 %v507
    %v858 = vunpack.c.h.b16 %v507
    %v859 = vunpack.c.l.b16 %v508
    %v860 = vunpack.c.h.b16 %v508
    %v861 = vunpack.c.l.b16 %v509
    %v862 = vunpack.c.h.b16 %v509
    %v863 = vunpack.c.l.b16 %v510
    %v864 = vunpack.c.h.b16 %v510
    %v865 = vunpack.c.l.b16 %v511
    %v866 = vunpack.c.h.b16 %v511
    %v867 = vunpack.c.l.b16 %v512
    %v868 = vunpack.c.h.b16 %v512
    %v869 = vunpack.c.l.b16 %v513
    %v870 = vunpack.c.h.b16 %v513
    %v871 = vunpack.c.l.b16 %v514
    %v872 = vunpack.c.h.b16 %v514
    %v873 = vunpack.c.l.b16 %v515
    %v874 = vunpack.c.h.b16 %v515
    %v875 = vunpack.c.l.b16 %v516
    %v876 = vunpack.c.h.b16 %v516
    %v877 = vunpack.c.l.b16 %v517
    %v878 = vunpack.c.h.b16 %v517
    %v879 = vunpack.c.l.b16 %v518
    %v880 = vunpack.c.h.b16 %v518
    %v881 = vunpack.c.l.b16 %v519
    %v882 = vunpack.c.h.b16 %v519
    %v883 = vunpack.c.l.b16 %v520
    %v884 = vunpack.c.h.b16 %v520
    %v885 = vunpack.c.l.b16 %v521
    %v886 = vunpack.c.h.b16 %v521
    %v887 = vunpack.c.l.b16 %v522
    %v888 = vunpack.c.h.b16 %v522
    %v889 = vunpack.c.l.b16 %v523
    %v890 = vunpack.c.h.b16 %v523
    %v891 = vunpack.c.l.b16 %v524
    %v892 = vunpack.c.h.b16 %v524
    %v893 = vunpack.c.l.b16 %v525
    %v894 = vunpack.c.h.b16 %v525
    %v895 = vunpack.c.l.b16 %v526
    %v896 = vunpack.c.h.b16 %v526
    %v897 = vunpack.c.l.b16 %v527
    %v898 = vunpack.c.h.b16 %v527
    %v899 = vunpack.c.l.b16 %v528
    %v900 = vunpack.c.h.b16 %v528
    %v901 = vunpack.c.l.b16 %v529
    %v902 = vunpack.c.h.b16 %v529
    %v903 = vunpack.c.l.b16 %v530
    %v904 = vunpack.c.h.b16 %v530
    %v905 = vunpack.c.l.b16 %v531
    %v906 = vunpack.c.h.b16 %v531
    %v907 = vunpack.c.l.b16 %v532
    %v908 = vunpack.c.h.b16 %v532
    %v909 = vunpack.c.l.b16 %v533
    %v910 = vunpack.c.h.b16 %v533
    %v911 = vunpack.c.l.b16 %v534
    %v912 = vunpack.c.h.b16 %v534
    %v913 = vunpack.c.l.b16 %v535
    %v914 = vunpack.c.h.b16 %v535
    %v915 = vunpack.c.l.b16 %v536
    %v916 = vunpack.c.h.b16 %v536
    %v917 = vunpack.c.l.b16 %v537
    %v918 = vunpack.c.h.b16 %v537
    %v919 = vunpack.c.l.b16 %v538
    %v920 = vunpack.c.h.b16 %v538
    %v921 = vunpack.c.l.b16 %v539
    %v922 = vunpack.c.h.b16 %v539
    %v923 = vunpack.c.l.b16 %v540
    %v924 = vunpack.c.h.b16 %v540
    %v925 = vunpack.c.l.b16 %v541
    %v926 = vunpack.c.h.b16 %v541
    %v927 = vunpack.c.l.b16 %v542
    %v928 = vunpack.c.h.b16 %v542
    %v929 = vpack.c.b16 %v681, %v673
    %v930 = vpack.c.b16 %v682, %v674
    %v931 = vpack.c.b16 %v683, %v675
    %v932 = vpack.c.b16 %v684, %v676
    %v933 = vpack.c.b16 %v685, %v677
    %v934 = vpack.c.b16 %v686, %v678
    %v935 = vpack.c.b16 %v687, %v679
    %v936 = vpack.c.b16 %v688, %v680
    %v937 = vpack.c.b16 %v697, %v689
    %v938 = vpack.c.b16 %v698, %v690
    %v939 = vpack.c.b16 %v699, %v691
    %v940 = vpack.c.b16 %v700, %v692
    %v941 = vpack.c.b16 %v701, %v693
    %v942 = vpack.c.b16 %v702, %v694
    %v943 = vpack.c.b16 %v703, %v695
    %v944 = vpack.c.b16 %v704, %v696
    %v945 = vpack.c.b16 %v713, %v705
    %v946 = vpack.c.b16 %v714, %v706
    %v947 = vpack.c.b16 %v715, %v707
    %v948 = vpack.c.b16 %v716, %v708
    %v949 = vpack.c.b16 %v717, %v709
    %v950 = vpack.c.b16 %v718, %v710
    %v951 = vpack.c.b16 %v719, %v711
    %v952 = vpack.c.b16 %v720, %v712
    %v953 = vpack.c.b16 %v729, %v721
    %v954 = vpack.c.b16 %v730, %v722
    %v955 = vpack.c.b16 %v731, %v723
    %v956 = vpack.c.b16 %v732, %v724
    %v957 = vpack.c.b16 %v733, %v725
    %v958 = vpack.c.b16 %v734, %v726
    %v959 = vpack.c.b16 %v735, %v727
    %v960 = vpack.c.b16 %v736, %v728
    %v961 = vpack.c.b16 %v745, %v737
    %v962 = vpack.c.b16 %v746, %v738
    %v963 = vpack.c.b16 %v747, %v739
    %v964 = vpack.c.b16 %v748, %v740
    %v965 = vpack.c.b16 %v749, %v741
    %v966 = vpack.c.b16 %v750, %v742
    %v967 = vpack.c.b16 %v751, %v743
    %v968 = vpack.c.b16 %v752, %v744
    %v969 = vpack.c.b16 %v761, %v753
    %v970 = vpack.c.b16 %v762, %v754
    %v971 = vpack.c.b16 %v763, %v755
    %v972 = vpack.c.b16 %v764, %v756
    %v973 = vpack.c.b16 %v765, %v757
    %v974 = vpack.c.b16 %v766, %v758
    %v975 = vpack.c.b16 %v767, %v759
    %v976 = vpack.c.b16 %v768, %v760
    %v977 = vpack.c.b16 %v777, %v769
    %v978 = vpack.c.b16 %v778, %v770
    %v979 = vpack.c.b16 %v779, %v771
    %v980 = vpack.c.b16 %v780, %v772
    %v981 = vpack.c.b16 %v781, %v773
    %v982 = vpack.c.b16 %v782, %v774
    %v983 = vpack.c.b16 %v783, %v775
    %v984 = vpack.c.b16 %v784, %v776
    %v985 = vpack.c.b16 %v793, %v785
    %v986 = vpack.c.b16 %v794, %v786
    %v987 = vpack.c.b16 %v795, %v787
    %v988 = vpack.c.b16 %v796, %v788
    %v989 = vpack.c.b16 %v797, %v789
    %v990 = vpack.c.b16 %v798, %v790
    %v991 = vpack.c.b16 %v799, %v791
    %v992 = vpack.c.b16 %v800, %v792
    %v993 = vpack.c.b16 %v809, %v801
    %v994 = vpack.c.b16 %v810, %v802
    %v995 = vpack.c.b16 %v811, %v803
    %v996 = vpack.c.b16 %v812, %v804
    %v997 = vpack.c.b16 %v813, %v805
    %v998 = vpack.c.b16 %v814, %v806
    %v999 = vpack.c.b16 %v815, %v807
    %v1000 = vpack.c.b16 %v816, %v808
    %v1001 = vpack.c.b16 %v825, %v817
    %v1002 = vpack.c.b16 %v826, %v818
    %v1003 = vpack.c.b16 %v827, %v819
    %v1004 = vpack.c.b16 %v828, %v820
    %v1005 = vpack.c.b16 %v829, %v821
    %v1006 = vpack.c.b16 %v830, %v822
    %v1007 = vpack.c.b16 %v831, %v823
    %v1008 = vpack.c.b16 %v832, %v824
    %v1009 = vpack.c.b16 %v841, %v833
    %v1010 = vpack.c.b16 %v842, %v834
    %v1011 = vpack.c.b16 %v843, %v835
    %v1012 = vpack.c.b16 %v844, %v836
    %v1013 = vpack.c.b16 %v845, %v837
    %v1014 = vpack.c.b16 %v846, %v838
    %v1015 = vpack.c.b16 %v847, %v839
    %v1016 = vpack.c.b16 %v848, %v840
    %v1017 = vpack.c.b16 %v857, %v849
    %v1018 = vpack.c.b16 %v858, %v850
    %v1019 = vpack.c.b16 %v859, %v851
    %v1020 = vpack.c.b16 %v860, %v852
    %v1021 = vpack.c.b16 %v861, %v853
    %v1022 = vpack.c.b16 %v862, %v854
    %v1023 = vpack.c.b16 %v863, %v855
    %v1024 = vpack.c.b16 %v864, %v856
    %v1025 = vpack.c.b16 %v873, %v865
    %v1026 = vpack.c.b16 %v874, %v866
    %v1027 = vpack.c.b16 %v875, %v867
    %v1028 = vpack.c.b16 %v876, %v868
    %v1029 = vpack.c.b16 %v877, %v869
    %v1030 = vpack.c.b16 %v878, %v870
    %v1031 = vpack.c.b16 %v879, %v871
    %v1032 = vpack.c.b16 %v880, %v872
    %v1033 = vpack.c.b16 %v889, %v881
    %v1034 = vpack.c.b16 %v890, %v882
    %v1035 = vpack.c.b16 %v891, %v883
    %v1036 = vpack.c.b16 %v892, %v884
    %v1037 = vpack.c.b16 %v893, %v885
    %v1038 = vpack.c.b16 %v894, %v886
    %v1039 = vpack.c.b16 %v895, %v887
    %v1040 = vpack.c.b16 %v896, %v888
    %v1041 = vpack.c.b16 %v905, %v897
    %v1042 = vpack.c.b16 %v906, %v898
    %v1043 = vpack.c.b16 %v907, %v899
    %v1044 = vpack.c.b16 %v908, %v900
    %v1045 = vpack.c.b16 %v909, %v901
    %v1046 = vpack.c.b16 %v910, %v902
    %v1047 = vpack.c.b16 %v911, %v903
    %v1048 = vpack.c.b16 %v912, %v904
    %v1049 = vpack.c.b16 %v921, %v913
    %v1050 = vpack.c.b16 %v922, %v914
    %v1051 = vpack.c.b16 %v923, %v915
    %v1052 = vpack.c.b16 %v924, %v916
    %v1053 = vpack.c.b16 %v925, %v917
    %v1054 = vpack.c.b16 %v926, %v918
    %v1055 = vpack.c.b16 %v927, %v919
    %v1056 = vpack.c.b16 %v928, %v920
    %1185 = vmatpush.bf16.msra.mxu0 %v985
    %1186 = vmatpush.bf16.msra.mxu0 %v977
    %1187 = vmatpush.bf16.msra.mxu0 %v969
    %1188 = vmatpush.bf16.msra.mxu0 %v961
    %1189 = vmatpush.bf16.msra.mxu0 %v953
    %1190 = vmatpush.bf16.msra.mxu0 %v945
    %1191 = vmatpush.bf16.msra.mxu0 %v937
    %1192 = vmatpush.bf16.msra.mxu0 %v929
    %1193 = vmatmul.bf16.gmra.mxu0 %v543
    %v1194 = vpop.f32.mrf.mxu0
    %v1195 = vadd.f32 0.0, %v1194
    %v1196 = vpop.f32.mrf.mxu0
    %1197 = vdwg.mxu0
    %1198 = vmatpush.bf16.msra.mxu0 %v1049
    %1199 = vmatpush.bf16.msra.mxu0 %v1041
    %1200 = vmatpush.bf16.msra.mxu0 %v1033
    %1201 = vmatpush.bf16.msra.mxu0 %v1025
    %1202 = vmatpush.bf16.msra.mxu0 %v1017
    %1203 = vmatpush.bf16.msra.mxu0 %v1009
    %1204 = vmatpush.bf16.msra.mxu0 %v1001
    %1205 = vmatpush.bf16.msra.mxu0 %v993
    %1206 = vmatmul.bf16.gmra.mxu0 %v544
    %v1207 = vpop.f32.mrf.mxu0
    %v1208 = vadd.f32 %v1195, %v1207
    %v1209 = vpop.f32.mrf.mxu0
    %1210 = vdwg.mxu0
    %1211 = vmatpush.bf16.msra.mxu0 %v986
    %1212 = vmatpush.bf16.msra.mxu0 %v978
    %1213 = vmatpush.bf16.msra.mxu0 %v970
    %1214 = vmatpush.bf16.msra.mxu0 %v962
    %1215 = vmatpush.bf16.msra.mxu0 %v954
    %1216 = vmatpush.bf16.msra.mxu0 %v946
    %1217 = vmatpush.bf16.msra.mxu0 %v938
    %1218 = vmatpush.bf16.msra.mxu0 %v930
    %1219 = vmatmul.bf16.gmra.mxu0 %v543
    %v1220 = vpop.f32.mrf.mxu0
    %v1221 = vadd.f32 0.0, %v1220
    %v1222 = vpop.f32.mrf.mxu0
    %1223 = vdwg.mxu0
    %1224 = vmatpush.bf16.msra.mxu0 %v1050
    %1225 = vmatpush.bf16.msra.mxu0 %v1042
    %1226 = vmatpush.bf16.msra.mxu0 %v1034
    %1227 = vmatpush.bf16.msra.mxu0 %v1026
    %1228 = vmatpush.bf16.msra.mxu0 %v1018
    %1229 = vmatpush.bf16.msra.mxu0 %v1010
    %1230 = vmatpush.bf16.msra.mxu0 %v1002
    %1231 = vmatpush.bf16.msra.mxu0 %v994
    %1232 = vmatmul.bf16.gmra.mxu0 %v544
    %v1233 = vpop.f32.mrf.mxu0
    %v1234 = vadd.f32 %v1221, %v1233
    %v1235 = vpop.f32.mrf.mxu0
    %1236 = vdwg.mxu0
    %1237 = vmatpush.bf16.msra.mxu0 %v987
    %1238 = vmatpush.bf16.msra.mxu0 %v979
    %1239 = vmatpush.bf16.msra.mxu0 %v971
    %1240 = vmatpush.bf16.msra.mxu0 %v963
    %1241 = vmatpush.bf16.msra.mxu0 %v955
    %1242 = vmatpush.bf16.msra.mxu0 %v947
    %1243 = vmatpush.bf16.msra.mxu0 %v939
    %1244 = vmatpush.bf16.msra.mxu0 %v931
    %1245 = vmatmul.bf16.gmra.mxu0 %v543
    %v1246 = vpop.f32.mrf.mxu0
    %v1247 = vadd.f32 0.0, %v1246
    %v1248 = vpop.f32.mrf.mxu0
    %1249 = vdwg.mxu0
    %1250 = vmatpush.bf16.msra.mxu0 %v1051
    %1251 = vmatpush.bf16.msra.mxu0 %v1043
    %1252 = vmatpush.bf16.msra.mxu0 %v1035
    %1253 = vmatpush.bf16.msra.mxu0 %v1027
    %1254 = vmatpush.bf16.msra.mxu0 %v1019
    %1255 = vmatpush.bf16.msra.mxu0 %v1011
    %1256 = vmatpush.bf16.msra.mxu0 %v1003
    %1257 = vmatpush.bf16.msra.mxu0 %v995
    %1258 = vmatmul.bf16.gmra.mxu0 %v544
    %v1259 = vpop.f32.mrf.mxu0
    %v1260 = vadd.f32 %v1247, %v1259
    %v1261 = vpop.f32.mrf.mxu0
    %1262 = vdwg.mxu0
    %1263 = vmatpush.bf16.msra.mxu0 %v988
    %1264 = vmatpush.bf16.msra.mxu0 %v980
    %1265 = vmatpush.bf16.msra.mxu0 %v972
    %1266 = vmatpush.bf16.msra.mxu0 %v964
    %1267 = vmatpush.bf16.msra.mxu0 %v956
    %1268 = vmatpush.bf16.msra.mxu0 %v948
    %1269 = vmatpush.bf16.msra.mxu0 %v940
    %1270 = vmatpush.bf16.msra.mxu0 %v932
    %1271 = vmatmul.bf16.gmra.mxu0 %v543
    %v1272 = vpop.f32.mrf.mxu0
    %v1273 = vadd.f32 0.0, %v1272
    %v1274 = vpop.f32.mrf.mxu0
    %1275 = vdwg.mxu0
    %1276 = vmatpush.bf16.msra.mxu0 %v1052
    %1277 = vmatpush.bf16.msra.mxu0 %v1044
    %1278 = vmatpush.bf16.msra.mxu0 %v1036
    %1279 = vmatpush.bf16.msra.mxu0 %v1028
    %1280 = vmatpush.bf16.msra.mxu0 %v1020
    %1281 = vmatpush.bf16.msra.mxu0 %v1012
    %1282 = vmatpush.bf16.msra.mxu0 %v1004
    %1283 = vmatpush.bf16.msra.mxu0 %v996
    %1284 = vmatmul.bf16.gmra.mxu0 %v544
    %v1285 = vpop.f32.mrf.mxu0
    %v1286 = vadd.f32 %v1273, %v1285
    %v1287 = vpop.f32.mrf.mxu0
    %1288 = vdwg.mxu0
    %1289 = vmatpush.bf16.msra.mxu0 %v989
    %1290 = vmatpush.bf16.msra.mxu0 %v981
    %1291 = vmatpush.bf16.msra.mxu0 %v973
    %1292 = vmatpush.bf16.msra.mxu0 %v965
    %1293 = vmatpush.bf16.msra.mxu0 %v957
    %1294 = vmatpush.bf16.msra.mxu0 %v949
    %1295 = vmatpush.bf16.msra.mxu0 %v941
    %1296 = vmatpush.bf16.msra.mxu0 %v933
    %1297 = vmatmul.bf16.gmra.mxu0 %v543
    %v1298 = vpop.f32.mrf.mxu0
    %v1299 = vadd.f32 0.0, %v1298
    %v1300 = vpop.f32.mrf.mxu0
    %1301 = vdwg.mxu0
    %1302 = vmatpush.bf16.msra.mxu0 %v1053
    %1303 = vmatpush.bf16.msra.mxu0 %v1045
    %1304 = vmatpush.bf16.msra.mxu0 %v1037
    %1305 = vmatpush.bf16.msra.mxu0 %v1029
    %1306 = vmatpush.bf16.msra.mxu0 %v1021
    %1307 = vmatpush.bf16.msra.mxu0 %v1013
    %1308 = vmatpush.bf16.msra.mxu0 %v1005
    %1309 = vmatpush.bf16.msra.mxu0 %v997
    %1310 = vmatmul.bf16.gmra.mxu0 %v544
    %v1311 = vpop.f32.mrf.mxu0
    %v1312 = vadd.f32 %v1299, %v1311
    %v1313 = vpop.f32.mrf.mxu0
    %1314 = vdwg.mxu0
    %1315 = vmatpush.bf16.msra.mxu0 %v990
    %1316 = vmatpush.bf16.msra.mxu0 %v982
    %1317 = vmatpush.bf16.msra.mxu0 %v974
    %1318 = vmatpush.bf16.msra.mxu0 %v966
    %1319 = vmatpush.bf16.msra.mxu0 %v958
    %1320 = vmatpush.bf16.msra.mxu0 %v950
    %1321 = vmatpush.bf16.msra.mxu0 %v942
    %1322 = vmatpush.bf16.msra.mxu0 %v934
    %1323 = vmatmul.bf16.gmra.mxu0 %v543
    %v1324 = vpop.f32.mrf.mxu0
    %v1325 = vadd.f32 0.0, %v1324
    %v1326 = vpop.f32.mrf.mxu0
    %1327 = vdwg.mxu0
    %1328 = vmatpush.bf16.msra.mxu0 %v1054
    %1329 = vmatpush.bf16.msra.mxu0 %v1046
    %1330 = vmatpush.bf16.msra.mxu0 %v1038
    %1331 = vmatpush.bf16.msra.mxu0 %v1030
    %1332 = vmatpush.bf16.msra.mxu0 %v1022
    %1333 = vmatpush.bf16.msra.mxu0 %v1014
    %1334 = vmatpush.bf16.msra.mxu0 %v1006
    %1335 = vmatpush.bf16.msra.mxu0 %v998
    %1336 = vmatmul.bf16.gmra.mxu0 %v544
    %v1337 = vpop.f32.mrf.mxu0
    %v1338 = vadd.f32 %v1325, %v1337
    %v1339 = vpop.f32.mrf.mxu0
    %1340 = vdwg.mxu0
    %1341 = vmatpush.bf16.msra.mxu0 %v991
    %1342 = vmatpush.bf16.msra.mxu0 %v983
    %1343 = vmatpush.bf16.msra.mxu0 %v975
    %1344 = vmatpush.bf16.msra.mxu0 %v967
    %1345 = vmatpush.bf16.msra.mxu0 %v959
    %1346 = vmatpush.bf16.msra.mxu0 %v951
    %1347 = vmatpush.bf16.msra.mxu0 %v943
    %1348 = vmatpush.bf16.msra.mxu0 %v935
    %1349 = vmatmul.bf16.gmra.mxu0 %v543
    %v1350 = vpop.f32.mrf.mxu0
    %v1351 = vadd.f32 0.0, %v1350
    %v1352 = vpop.f32.mrf.mxu0
    %1353 = vdwg.mxu0
    %1354 = vmatpush.bf16.msra.mxu0 %v1055
    %1355 = vmatpush.bf16.msra.mxu0 %v1047
    %1356 = vmatpush.bf16.msra.mxu0 %v1039
    %1357 = vmatpush.bf16.msra.mxu0 %v1031
    %1358 = vmatpush.bf16.msra.mxu0 %v1023
    %1359 = vmatpush.bf16.msra.mxu0 %v1015
    %1360 = vmatpush.bf16.msra.mxu0 %v1007
    %1361 = vmatpush.bf16.msra.mxu0 %v999
    %1362 = vmatmul.bf16.gmra.mxu0 %v544
    %v1363 = vpop.f32.mrf.mxu0
    %v1364 = vadd.f32 %v1351, %v1363
    %v1365 = vpop.f32.mrf.mxu0
    %1366 = vdwg.mxu0
    %1367 = vmatpush.bf16.msra.mxu0 %v992
    %1368 = vmatpush.bf16.msra.mxu0 %v984
    %1369 = vmatpush.bf16.msra.mxu0 %v976
    %1370 = vmatpush.bf16.msra.mxu0 %v968
    %1371 = vmatpush.bf16.msra.mxu0 %v960
    %1372 = vmatpush.bf16.msra.mxu0 %v952
    %1373 = vmatpush.bf16.msra.mxu0 %v944
    %1374 = vmatpush.bf16.msra.mxu0 %v936
    %1375 = vmatmul.bf16.gmra.mxu0 %v543
    %v1376 = vpop.f32.mrf.mxu0
    %v1377 = vadd.f32 0.0, %v1376
    %v1378 = vpop.f32.mrf.mxu0
    %1379 = vdwg.mxu0
    %1380 = vmatpush.bf16.msra.mxu0 %v1056
    %1381 = vmatpush.bf16.msra.mxu0 %v1048
    %1382 = vmatpush.bf16.msra.mxu0 %v1040
    %1383 = vmatpush.bf16.msra.mxu0 %v1032
    %1384 = vmatpush.bf16.msra.mxu0 %v1024
    %1385 = vmatpush.bf16.msra.mxu0 %v1016
    %1386 = vmatpush.bf16.msra.mxu0 %v1008
    %1387 = vmatpush.bf16.msra.mxu0 %v1000
    %1388 = vmatmul.bf16.gmra.mxu0 %v544
    %v1389 = vpop.f32.mrf.mxu0
    %v1390 = vadd.f32 %v1377, %v1389
    %v1391 = vpop.f32.mrf.mxu0
    %1392 = vdwg.mxu0
    %v1393 = vld [vmem:[%s10 + $0x6] sm:$0xf]
    %v1395 = vperm.slane %v1393, 0
    %v1396 = vperm.slane %v1393, 1
    %v1397 = vperm.slane %v1393, 2
    %v1398 = vperm.slane %v1393, 3
    %v1403 = vadd.f32 %v1208, %v1395
    %v1404 = vadd.f32 %v1234, %v1396
    %v1405 = vadd.f32 %v1260, %v1397
    %v1406 = vadd.f32 %v1286, %v1398
    %v1407 = vld [vmem:[%s10 + $0x3] sm:$0x1]
    %v1409 = vperm.slane %v1407, 0
    %v1411 = vadd.f32 %v1312, %v1409
    %v1412 = vmax.f32 %v1411, 0.0
    %v1413 = vsub.f32 0.0, %v1403
    %v1414 = vmul.f32 %v1413, 1.442695
    %v1415 = vpow.pop %v1414
    %v1416 = vadd.f32 %v1415, 1.0
    %v1417 = vrcp.pop %v1416
    %v1418 = vmul.f32 %v1416, %v1417
    %v1419 = vsub.f32 1.0, %v1418
    %v1420 = vmul.f32 %v1417, %v1419
    %v1421 = vadd.f32 %v1417, %v1420
    %vm1422 = vweird.f32 %v1416
    %vm1423 = vweird.f32 %v1417
    %vm1424 = vmor %vm1422, %vm1423
    %v1425 = vsel %vm1424, %v1417, %v1421
    %v1426 = vand.u32 2147483647, %v1416
    %vm1427 = vcmp.eq.f32.partialorder %v1426, 8.507059e+37
    %v1428 = vand.u32 %v1416, 2147483648
    %v1429 = vor.u32 1.1754944e-38, %v1428
    %v1430 = vsel %vm1427, %v1429, %v1425
    %v1431 = vmul.f32 1.0, %v1430
    %v1432 = vsub.f32 0.0, %v1404
    %v1433 = vmul.f32 %v1432, 1.442695
    %v1434 = vpow.pop %v1433
    %v1435 = vadd.f32 %v1434, 1.0
    %v1436 = vrcp.pop %v1435
    %v1437 = vmul.f32 %v1435, %v1436
    %v1438 = vsub.f32 1.0, %v1437
    %v1439 = vmul.f32 %v1436, %v1438
    %v1440 = vadd.f32 %v1436, %v1439
    %vm1441 = vweird.f32 %v1435
    %vm1442 = vweird.f32 %v1436
    %vm1443 = vmor %vm1441, %vm1442
    %v1444 = vsel %vm1443, %v1436, %v1440
    %v1445 = vand.u32 2147483647, %v1435
    %vm1446 = vcmp.eq.f32.partialorder %v1445, 8.507059e+37
    %v1447 = vand.u32 %v1435, 2147483648
    %v1448 = vor.u32 1.1754944e-38, %v1447
    %v1449 = vsel %vm1446, %v1448, %v1444
    %v1450 = vmul.f32 1.0, %v1449
    %v1451 = vtanh.pop %v1405
    %v1452 = vsub.f32 0.0, %v1406
    %v1453 = vmul.f32 %v1452, 1.442695
    %v1454 = vpow.pop %v1453
    %v1455 = vadd.f32 %v1454, 1.0
    %v1456 = vrcp.pop %v1455
    %v1457 = vmul.f32 %v1455, %v1456
    %v1458 = vsub.f32 1.0, %v1457
    %v1459 = vmul.f32 %v1456, %v1458
    %v1460 = vadd.f32 %v1456, %v1459
    %vm1461 = vweird.f32 %v1455
    %vm1462 = vweird.f32 %v1456
    %vm1463 = vmor %vm1461, %vm1462
    %v1464 = vsel %vm1463, %v1456, %v1460
    %v1465 = vand.u32 2147483647, %v1455
    %vm1466 = vcmp.eq.f32.partialorder %v1465, 8.507059e+37
    %v1467 = vand.u32 %v1455, 2147483648
    %v1468 = vor.u32 1.1754944e-38, %v1467
    %v1469 = vsel %vm1466, %v1468, %v1464
    %v1470 = vmul.f32 1.0, %v1469
    %v1471 = vmul.f32 %v1450, %v94
    %v1472 = vmul.f32 %v1431, %v1451
    %v1473 = vadd.f32 %v1471, %v1472
    %v1474 = vtanh.pop %v1473
    %v1475 = vmul.f32 %v1470, %v1474
    %v1476 = vld [vmem:[#allocation5 + $0x2c] sm:$0xff]
    %v1477 = vld [vmem:[#allocation5 + $0x64] sm:$0xff]
    %v1478 = vld [vmem:[#allocation5 + $0x9c] sm:$0xff]
    %v1479 = vld [vmem:[#allocation5 + $0xd4] sm:$0xff]
    %v1480 = vld [vmem:[#allocation5 + $0x10c] sm:$0xff]
    %v1481 = vld [vmem:[#allocation5 + $0x144] sm:$0xff]
    %v1482 = vld [vmem:[#allocation5 + $0x17c] sm:$0xff]
    %v1483 = vld [vmem:[#allocation5 + $0x1b4] sm:$0xff]
    %v1484 = vpack.c.bf16 %v1412, %v1412
    %v1493 = vunpack.c.l.b16 %v1476
    %v1494 = vunpack.c.h.b16 %v1476
    %v1495 = vunpack.c.l.b16 %v1477
    %v1496 = vunpack.c.h.b16 %v1477
    %v1497 = vunpack.c.l.b16 %v1478
    %v1498 = vunpack.c.h.b16 %v1478
    %v1499 = vunpack.c.l.b16 %v1479
    %v1500 = vunpack.c.h.b16 %v1479
    %v1501 = vunpack.c.l.b16 %v1480
    %v1502 = vunpack.c.h.b16 %v1480
    %v1503 = vunpack.c.l.b16 %v1481
    %v1504 = vunpack.c.h.b16 %v1481
    %v1505 = vunpack.c.l.b16 %v1482
    %v1506 = vunpack.c.h.b16 %v1482
    %v1507 = vunpack.c.l.b16 %v1483
    %v1508 = vunpack.c.h.b16 %v1483
    %v1509 = vpack.c.b16 %v1495, %v1493
    %v1510 = vpack.c.b16 %v1496, %v1494
    %v1511 = vpack.c.b16 %v1499, %v1497
    %v1512 = vpack.c.b16 %v1500, %v1498
    %v1513 = vpack.c.b16 %v1503, %v1501
    %v1514 = vpack.c.b16 %v1504, %v1502
    %v1515 = vpack.c.b16 %v1507, %v1505
    %v1516 = vpack.c.b16 %v1508, %v1506
    %v1526 = vsel %vm411, %v1484, 0
    %1528 = vmatpush.bf16.msra.mxu0 0
    %1529 = vmatpush.bf16.msra.mxu0 0
    %1530 = vmatpush.bf16.msra.mxu0 0
    %1531 = vmatpush.bf16.msra.mxu0 0
    %1532 = vmatpush.bf16.msra.mxu0 %v1515
    %1533 = vmatpush.bf16.msra.mxu0 %v1513
    %1534 = vmatpush.bf16.msra.mxu0 %v1511
    %1535 = vmatpush.bf16.msra.mxu0 %v1509
    %1536 = vmatmul.bf16.gmra.mxu0 %v1526
    %v1537 = vpop.f32.mrf.mxu0
    %v1538 = vadd.f32 0.0, %v1537
    %v1539 = vpop.f32.mrf.mxu0
    %1540 = vdwg.mxu0
    %1541 = vmatpush.bf16.msra.mxu0 0
    %1542 = vmatpush.bf16.msra.mxu0 0
    %1543 = vmatpush.bf16.msra.mxu0 0
    %1544 = vmatpush.bf16.msra.mxu0 0
    %1545 = vmatpush.bf16.msra.mxu0 %v1516
    %1546 = vmatpush.bf16.msra.mxu0 %v1514
    %1547 = vmatpush.bf16.msra.mxu0 %v1512
    %1548 = vmatpush.bf16.msra.mxu0 %v1510
    %1549 = vmatmul.bf16.gmra.mxu0 %v1526
    %v1550 = vpop.f32.mrf.mxu0
    %v1551 = vadd.f32 0.0, %v1550
    %v1552 = vpop.f32.mrf.mxu0
    %1553 = vdwg.mxu0
    %v1554 = vadd.f32 %v1538, %v1338
    %v1555 = vld [vmem:[%s10 + $0x4] sm:$0x1]
    %v1557 = vperm.slane %v1555, 0
    %v1559 = vadd.f32 %v1554, %v1557
    %v1560 = vadd.f32 %v1551, %v1364
    %v1561 = vld [vmem:[%s10 + $0x5] sm:$0x1]
    %v1563 = vperm.slane %v1561, 0
    %v1565 = vadd.f32 %v1560, %v1563
    %v1566 = vsub.f32 0.0, %v1559
    %v1567 = vmul.f32 %v1566, 1.442695
    %v1568 = vpow.pop %v1567
    %v1569 = vadd.f32 %v1568, 1.0
    %v1570 = vrcp.pop %v1569
    %v1571 = vmul.f32 %v1569, %v1570
    %v1572 = vsub.f32 1.0, %v1571
    %v1573 = vmul.f32 %v1570, %v1572
    %v1574 = vadd.f32 %v1570, %v1573
    %vm1575 = vweird.f32 %v1569
    %vm1576 = vweird.f32 %v1570
    %vm1577 = vmor %vm1575, %vm1576
    %v1578 = vsel %vm1577, %v1570, %v1574
    %v1579 = vand.u32 2147483647, %v1569
    %vm1580 = vcmp.eq.f32.partialorder %v1579, 8.507059e+37
    %v1581 = vand.u32 %v1569, 2147483648
    %v1582 = vor.u32 1.1754944e-38, %v1581
    %v1583 = vsel %vm1580, %v1582, %v1578
    %v1584 = vmul.f32 1.0, %v1583
    %v1585 = vtanh.pop %v1559
    %1587 = vrot.lane.b32.xlu0 %v131, 32
    %v1588 = vpop.permute.xlu0 %1587
    %v1590 = vmul.f32 %v1584, %v1588
    %1592 = vrot.lane.b32.xlu0 %v1585, 64
    %v1593 = vpop.permute.xlu0 %1592
    %v1595 = vmul.f32 %v1584, %v1593
    %1597 = vrot.lane.b32.xlu0 %v1595, 32
    %v1598 = vpop.permute.xlu0 %1597
    %v1600 = vadd.f32 %v1590, %v1598
    %v1601 = vtanh.pop %v1600
    %1603 = vrot.lane.b32.xlu0 %v1601, 64
    %v1604 = vpop.permute.xlu0 %1603
    %v1606 = vmul.f32 %v1584, %v1604
    %1608 = vrot.lane.b32.xlu0 %v1606, 32
    %v1609 = vpop.permute.xlu0 %1608
    %1611 = vrot.lane.b32.xlu0 %v1606, 64
    %v1612 = vpop.permute.xlu0 %1611
    %1614 = vrot.lane.b32.xlu0 %v1606, 96
    %v1615 = vpop.permute.xlu0 %1614
    %v1617 = vsel %vm408, %v1609, %v1612
    %v1618 = vsel %vm411, %v1617, %v1615
    %v1619 = vsel %vm413, %v1618, %v1606
    %v1620 = vsel %vm103, %v1619, %v90
    %1622 = vrot.lane.b32.xlu0 %v1600, 96
    %v1623 = vpop.permute.xlu0 %1622
    %1625 = vrot.lane.b32.xlu0 %v1600, 32
    %v1626 = vpop.permute.xlu0 %1625
    %1628 = vrot.lane.b32.xlu0 %v1600, 64
    %v1629 = vpop.permute.xlu0 %1628
    %v1631 = vsel %vm408, %v1623, %v1600
    %v1632 = vsel %vm411, %v1631, %v1626
    %v1633 = vsel %vm413, %v1632, %v1629
    %v1634 = vsel %vm103, %v1633, %v91
    %1636 = vrot.lane.b32.xlu0 %v1620, 96
    %v1637 = vpop.permute.xlu0 %1636
    %v1639 = vadd.f32 %v1620, %v1637
    %1640 = vrot.lane.b32.xlu0 %v1620, 64
    %v1641 = vpop.permute.xlu0 %1640
    %v1643 = vadd.f32 %v1639, %v1641
    %1644 = vrot.lane.b32.xlu0 %v1620, 32
    %v1645 = vpop.permute.xlu0 %1644
    %v1647 = vadd.f32 %v1643, %v1645
    %v1648 = vmul.f32 %v1647, 0.25
    %v1649 = vsub.f32 0.0, %v1565
    %v1650 = vmul.f32 %v1649, 1.442695
    %v1651 = vpow.pop %v1650
    %v1652 = vadd.f32 %v1651, 1.0
    %v1653 = vrcp.pop %v1652
    %v1654 = vmul.f32 %v1652, %v1653
    %v1655 = vsub.f32 1.0, %v1654
    %v1656 = vmul.f32 %v1653, %v1655
    %v1657 = vadd.f32 %v1653, %v1656
    %vm1658 = vweird.f32 %v1652
    %vm1659 = vweird.f32 %v1653
    %vm1660 = vmor %vm1658, %vm1659
    %v1661 = vsel %vm1660, %v1653, %v1657
    %v1662 = vand.u32 2147483647, %v1652
    %vm1663 = vcmp.eq.f32.partialorder %v1662, 8.507059e+37
    %v1664 = vand.u32 %v1652, 2147483648
    %v1665 = vor.u32 1.1754944e-38, %v1664
    %v1666 = vsel %vm1663, %v1665, %v1661
    %v1667 = vmul.f32 1.0, %v1666
    %v1668 = vtanh.pop %v1565
    %1670 = vrot.lane.b32.xlu0 %v154, 32
    %v1671 = vpop.permute.xlu0 %1670
    %v1673 = vmul.f32 %v1667, %v1671
    %1675 = vrot.lane.b32.xlu0 %v1668, 64
    %v1676 = vpop.permute.xlu0 %1675
    %v1678 = vmul.f32 %v1667, %v1676
    %1680 = vrot.lane.b32.xlu0 %v1678, 32
    %v1681 = vpop.permute.xlu0 %1680
    %v1683 = vadd.f32 %v1673, %v1681
    %v1684 = vtanh.pop %v1683
    %1686 = vrot.lane.b32.xlu0 %v1684, 64
    %v1687 = vpop.permute.xlu0 %1686
    %v1689 = vmul.f32 %v1667, %v1687
    %1691 = vrot.lane.b32.xlu0 %v1689, 32
    %v1692 = vpop.permute.xlu0 %1691
    %1694 = vrot.lane.b32.xlu0 %v1689, 64
    %v1695 = vpop.permute.xlu0 %1694
    %v1697 = vsel %vm408, %v1692, %v1695
    %v1698 = vsel %vm138, %v1697, %v92
    %1700 = vrot.lane.b32.xlu0 %v1683, 96
    %v1701 = vpop.permute.xlu0 %1700
    %v1703 = vsel %vm408, %v1701, %v1683
    %v1704 = vsel %vm138, %v1703, %v142
    %1706 = vrot.lane.b32.xlu0 %v1698, 96
    %v1707 = vpop.permute.xlu0 %1706
    %v1709 = vadd.f32 %v1698, %v1707
    %v1710 = vmul.f32 %v1709, 0.5
    %v1711 = vld [vmem:[%s10 + $0xb] sm:$0x1]
    %v1713 = vperm.slane %v1711, 0
    %v1715 = vmul.f32 %v1648, %v1713
    %v1716 = vsel %vm408, %v1715, 0.0
    %1717 = vadd.xlane.f32.xlu0 %v1716
    %v1718 = vpop.xlane.xlu0 %1717
    %v1719 = vld [vmem:[%s10 + $0xe] sm:$0x1]
    %v1721 = vperm.slane %v1719, 0
    %v1723 = vadd.f32 %v1718, %v1721
    %v1724 = vmul.f32 %v1648, %v1648
    %v1725 = vsel %vm408, %v1724, 0.0
    %1726 = vadd.xlane.f32.xlu0 %v1725
    %v1727 = vpop.xlane.xlu0 %1726
    %v1728 = vmax.f32 %v1727, 1e-24
    %v1729 = vrsqrt.pop %v1728
    %v1730 = vmul.f32 %v1729, %v1728
    %v1731 = vmul.f32 %v1730, %v1729
    %v1732 = vmul.f32 0.5, %v1731
    %v1733 = vsub.f32 1.5, %v1732
    %v1734 = vmul.f32 %v1729, %v1733
    %vm1735 = vweird.f32 %v1728
    %vm1736 = vweird.f32 %v1729
    %vm1737 = vmor %vm1735, %vm1736
    %v1738 = vsel %vm1737, %v1729, %v1734
    %v1739 = vmul.f32 %v1648, %v1738
    %1741 = vrot.lane.b32.xlu0 %v1475, 32
    %v1742 = vpop.permute.xlu0 %1741
    %v1744 = vsel %vm408, %v1739, %v1742
    %v1745 = vld [vmem:[#allocation5 + $0x34] sm:$0xf]
    %v1746 = vld [vmem:[#allocation5 + $0x6c] sm:$0xf]
    %v1747 = vld [vmem:[#allocation5 + $0xa4] sm:$0xf]
    %v1748 = vld [vmem:[#allocation5 + $0xdc] sm:$0xf]
    %v1749 = vld [vmem:[#allocation5 + $0x114] sm:$0xf]
    %v1750 = vld [vmem:[#allocation5 + $0x14c] sm:$0xf]
    %v1751 = vld [vmem:[#allocation5 + $0x184] sm:$0xf]
    %v1752 = vld [vmem:[#allocation5 + $0x1bc] sm:$0xf]
    %v1753 = vld [vmem:[#allocation5 + $0x1f4] sm:$0xf]
    %v1754 = vld [vmem:[#allocation5 + $0x22c] sm:$0xf]
    %v1755 = vld [vmem:[#allocation5 + $0x264] sm:$0xf]
    %v1756 = vld [vmem:[#allocation5 + $0x29c] sm:$0xf]
    %v1757 = vld [vmem:[#allocation5 + $0x2d4] sm:$0xf]
    %v1758 = vld [vmem:[#allocation5 + $0x30c] sm:$0xf]
    %v1759 = vld [vmem:[#allocation5 + $0x344] sm:$0xf]
    %v1760 = vld [vmem:[#allocation5 + $0x37c] sm:$0xf]
    %v1761 = vld [vmem:[#allocation5 + $0x3b4] sm:$0xf]
    %v1762 = vld [vmem:[#allocation5 + $0x3ec] sm:$0xf]
    %v1763 = vld [vmem:[#allocation5 + $0x424] sm:$0xf]
    %v1764 = vld [vmem:[#allocation5 + $0x45c] sm:$0xf]
    %v1765 = vpack.c.bf16 %v1744, %v1744
    %v1766 = vpack.c.bf16 %v1742, %v1742
    %v1787 = vunpack.c.l.b16 %v1745
    %v1788 = vunpack.c.l.b16 %v1746
    %v1789 = vunpack.c.l.b16 %v1747
    %v1790 = vunpack.c.l.b16 %v1748
    %v1791 = vunpack.c.l.b16 %v1749
    %v1792 = vunpack.c.l.b16 %v1750
    %v1793 = vunpack.c.l.b16 %v1751
    %v1794 = vunpack.c.l.b16 %v1752
    %v1795 = vunpack.c.l.b16 %v1753
    %v1796 = vunpack.c.l.b16 %v1754
    %v1797 = vunpack.c.l.b16 %v1755
    %v1798 = vunpack.c.l.b16 %v1756
    %v1799 = vunpack.c.l.b16 %v1757
    %v1800 = vunpack.c.l.b16 %v1758
    %v1801 = vunpack.c.l.b16 %v1759
    %v1802 = vunpack.c.l.b16 %v1760
    %v1803 = vunpack.c.l.b16 %v1761
    %v1804 = vunpack.c.l.b16 %v1762
    %v1805 = vunpack.c.l.b16 %v1763
    %v1806 = vunpack.c.l.b16 %v1764
    %v1807 = vpack.c.b16 %v1788, %v1787
    %v1808 = vpack.c.b16 %v1790, %v1789
    %v1809 = vpack.c.b16 %v1792, %v1791
    %v1810 = vpack.c.b16 %v1794, %v1793
    %v1811 = vpack.c.b16 %v1796, %v1795
    %v1812 = vpack.c.b16 %v1798, %v1797
    %v1813 = vpack.c.b16 %v1800, %v1799
    %v1814 = vpack.c.b16 %v1802, %v1801
    %v1815 = vpack.c.b16 %v1804, %v1803
    %v1816 = vpack.c.b16 %v1806, %v1805
    %v1828 = vsel %vm408, %v1766, 0
    %1830 = vmatpush.bf16.msra.mxu0 %v1814
    %1831 = vmatpush.bf16.msra.mxu0 %v1813
    %1832 = vmatpush.bf16.msra.mxu0 %v1812
    %1833 = vmatpush.bf16.msra.mxu0 %v1811
    %1834 = vmatpush.bf16.msra.mxu0 %v1810
    %1835 = vmatpush.bf16.msra.mxu0 %v1809
    %1836 = vmatpush.bf16.msra.mxu0 %v1808
    %1837 = vmatpush.bf16.msra.mxu0 %v1807
    %1838 = vmatmul.bf16.gmra.mxu0 %v1765
    %v1839 = vpop.f32.mrf.mxu0
    %v1840 = vadd.f32 0.0, %v1839
    %v1841 = vpop.f32.mrf.mxu0
    %1842 = vdwg.mxu0
    %1843 = vmatpush.bf16.msra.mxu0 0
    %1844 = vmatpush.bf16.msra.mxu0 0
    %1845 = vmatpush.bf16.msra.mxu0 0
    %1846 = vmatpush.bf16.msra.mxu0 0
    %1847 = vmatpush.bf16.msra.mxu0 0
    %1848 = vmatpush.bf16.msra.mxu0 0
    %1849 = vmatpush.bf16.msra.mxu0 %v1816
    %1850 = vmatpush.bf16.msra.mxu0 %v1815
    %1851 = vmatmul.bf16.gmra.mxu0 %v1828
    %v1852 = vpop.f32.mrf.mxu0
    %v1853 = vadd.f32 %v1840, %v1852
    %v1854 = vpop.f32.mrf.mxu0
    %1855 = vdwg.mxu0
    %v1856 = vld [vmem:[%s10 + $0xa] sm:$0x1]
    %v1858 = vperm.slane %v1856, 0
    %1859 = vrot.lane.b32.xlu0 %v1858, 32
    %v1860 = vpop.permute.xlu0 %1859
    %v1862 = vadd.f32 %v1853, %v1860
    %v1863 = vmax.f32 %v1862, 0.0
    %v1864 = vadd.f32 %v1853, %v1710
    %v1865 = vld [vmem:[%s10 + $0xc] sm:$0x1]
    %v1867 = vperm.slane %v1865, 0
    %v1869 = vmul.f32 %v1864, %v1867
    %v1870 = vsel %vm408, %v1869, 0.0
    %1871 = vadd.xlane.f32.xlu0 %v1870
    %v1872 = vpop.xlane.xlu0 %1871
    %v1873 = vadd.f32 %v1872, %v1721
    %v1874 = vmul.f32 %v1864, %v1864
    %v1875 = vsel %vm408, %v1874, 0.0
    %1876 = vadd.xlane.f32.xlu0 %v1875
    %v1877 = vpop.xlane.xlu0 %1876
    %v1878 = vmax.f32 %v1877, 1e-24
    %v1879 = vrsqrt.pop %v1878
    %v1880 = vmul.f32 %v1879, %v1878
    %v1881 = vmul.f32 %v1880, %v1879
    %v1882 = vmul.f32 0.5, %v1881
    %v1883 = vsub.f32 1.5, %v1882
    %v1884 = vmul.f32 %v1879, %v1883
    %vm1885 = vweird.f32 %v1878
    %vm1886 = vweird.f32 %v1879
    %vm1887 = vmor %vm1885, %vm1886
    %v1888 = vsel %vm1887, %v1879, %v1884
    %v1889 = vmul.f32 %v1864, %v1888
    %v1890 = vld [vmem:[%s10 + $0xd] sm:$0x1]
    %v1892 = vperm.slane %v1890, 0
    %1893 = vrot.lane.b32.xlu0 %v1892, 32
    %v1894 = vpop.permute.xlu0 %1893
    %v1896 = vmul.f32 %v1863, %v1894
    %1898 = vrot.lane.b32.xlu0 %v1896, 96
    %v1899 = vpop.permute.xlu0 %1898
    %vm1901 = vcmask 408576
    %v1902 = vsel %vm1901, %v1899, 0.0
    %1903 = vadd.xlane.f32.xlu0 %v1902
    %v1904 = vpop.xlane.xlu0 %1903
    %v1905 = vadd.f32 %v1904, %v1721
    %v1906 = vmul.f32 %v1390, %v1475
    %vm1907 = vcmp.lt.s32.totalorder %v96, 0
    %v1908 = vsub.s32 0, %v96
    %v1909 = vsel %vm1907, %v1908, %v96
    %v1910 = vshrl.u32 %v1909, 2
    %v1911 = vand.u32 %v1909, 3
    %v1912 = vsub.s32 0, %v1911
    %v1913 = vsel %vm1907, %v1912, %v1911
    %vm1914 = vcmp.ne.s32.totalorder %v1913, 0
    %vm1915 = vcmp.lt.s32.totalorder %v1913, 0
    %vm1916 = vmand %vm1915, %vm1914
    %v1917 = vadd.s32 %v1913, 4
    %v1918 = vsel %vm1916, %v1917, %v1913
    %vm1919 = vcmp.eq.s32.totalorder %v1918, 0
    %v1920 = vsel %vm1919, %v1906, 0.0
    %1921 = vadd.xlane.f32.xlu0 %v1920
    %v1922 = vpop.xlane.xlu0 %1921
    %vm1923 = vcmp.eq.s32.totalorder %v1918, 1
    %v1924 = vsel %vm1923, %v1906, 0.0
    %1925 = vadd.xlane.f32.xlu0 %v1924
    %v1926 = vpop.xlane.xlu0 %1925
    %vm1927 = vcmp.eq.s32.totalorder %v1918, 2
    %v1928 = vsel %vm1927, %v1906, 0.0
    %1929 = vadd.xlane.f32.xlu0 %v1928
    %v1930 = vpop.xlane.xlu0 %1929
    %vm1931 = vcmp.eq.s32.totalorder %v1918, 3
    %v1932 = vsel %vm1931, %v1906, 0.0
    %1933 = vadd.xlane.f32.xlu0 %v1932
    %v1934 = vpop.xlane.xlu0 %1933
    %vm1935 = vcmask 7168
    %v1936 = vsel %vm1935, %v1922, %v1926
    %vm1937 = vcmask 15360
    %v1938 = vsel %vm1937, %v1936, %v1930
    %vm1939 = vcmask 23552
    %v1940 = vsel %vm1939, %v1938, %v1934
    %vm1941 = vcmask 31744
    %v1942 = vsel %vm1941, %v1940, -inf
    %1943 = vmax.xlane.f32.xlu0 %v1942
    %v1944 = vpop.xlane.xlu0 %1943
    %v1945 = vsub.f32 %v1940, %v1944
    %v1946 = vmul.f32 %v1945, 1.442695
    %v1947 = vpow.pop %v1946
    %v1948 = vsel %vm1941, %v1947, 0.0
    %1949 = vadd.xlane.f32.xlu0 %v1948
    %v1950 = vpop.xlane.xlu0 %1949
    %v1951 = vrcp.pop %v1950
    %v1952 = vmul.f32 %v1950, %v1951
    %v1953 = vsub.f32 1.0, %v1952
    %v1954 = vmul.f32 %v1951, %v1953
    %v1955 = vadd.f32 %v1951, %v1954
    %vm1956 = vweird.f32 %v1950
    %vm1957 = vweird.f32 %v1951
    %vm1958 = vmor %vm1956, %vm1957
    %v1959 = vsel %vm1958, %v1951, %v1955
    %v1960 = vand.u32 2147483647, %v1950
    %vm1961 = vcmp.eq.f32.partialorder %v1960, 8.507059e+37
    %v1962 = vand.u32 %v1950, 2147483648
    %v1963 = vor.u32 1.1754944e-38, %v1962
    %v1964 = vsel %vm1961, %v1963, %v1959
    %v1965 = vmul.f32 %v1947, %v1964
    %1966 = vst [vmem:[%s11] sm:$0xff] 0.0
    %1967 = vst [vmem:[%s11 + $0x8] sm:$0xff] 0.0
    %1969 = vrot.lane.b32.xlu0 %v1412, 32
    %v1970 = vpop.permute.xlu0 %1969
    %1973 = vrot.lane.b32.xlu0 %v1889, 64
    %v1974 = vpop.permute.xlu0 %1973
    %1976 = vrot.lane.b32.xlu0 %v1412, 64
    %v1977 = vpop.permute.xlu0 %1976
    %v1979 = vsel %vm408, %v1739, %v1970
    %v1980 = vsel %vm411, %v1979, %v1974
    %v1981 = vsel %vm413, %v1980, %v1977
    %1982 = vst [vmem:[%s11] sm:$0xff] %v1981
    %1984 = vrot.lane.b32.xlu0 %v1723, 4
    %v1985 = vpop.permute.xlu0 %1984
    %1988 = vrot.lane.b32.xlu0 %v1873, 4
    %v1989 = vpop.permute.xlu0 %1988
    %1992 = vrot.lane.b32.xlu0 %v1905, 4
    %v1993 = vpop.permute.xlu0 %1992
    %v1995 = vsel %vm1941, %v1965, %v1985
    %vm1996 = vcmask 39936
    %v1997 = vsel %vm1996, %v1995, %v1989
    %vm1998 = vcmask 48128
    %v1999 = vsel %vm1998, %v1997, %v1993
    %vm2000 = vcmask 56320
    %2001 = vst.msk [vmem:[%s11 + $0x8] sm:$0xff] %vm2000, %v1999
    %2002 = vst [vmem:[%s12] sm:$0xff] %v1620
    %2003 = vst [vmem:[%s12 + $0x8] sm:$0xff] %v1634
    %2005 = vrot.lane.b32.xlu0 %v1704, 64
    %v2006 = vpop.permute.xlu0 %2005
    %v2008 = vsel %vm411, %v1698, %v2006
    %2009 = vst [vmem:[%s13] sm:$0xff] %v2008
    %2010 = vst [vmem:[%s14] sm:$0xff] %v1475
    %2011 = vst [vmem:[%s14 + $0x8] sm:$0xff] %v1473
    // Predicated region
    $region54: #{_fused_forward_impl.1} parent=1 // pred_check
      _
    $region55: #{_fused_forward_impl.1} parent=1 // pred_check_branch
      %2013 = sbr.rel (0) target = $region57
    $region56: #{_fused_forward_impl.1} parent=1 // pred_region
      _
    $region57: #{_fused_forward_impl.1} parent=1 // pred_fallthru
      _
    // Predicated region
    $region58: #{_fused_forward_impl.1} parent=1 // pred_check
      _
    $region59: #{_fused_forward_impl.1} parent=1 // pred_check_branch
      %2015 = sbr.rel (0) target = $region61
    $region60: #{_fused_forward_impl.1} parent=1 // pred_region
      _
    $region61: #{_fused_forward_impl.1} parent=1 // pred_fallthru
      _
    // Predicated region
    $region62: #{_fused_forward_impl.1} parent=1 // pred_check
      _
    $region63: #{_fused_forward_impl.1} parent=1 // pred_check_branch
      %2017 = sbr.rel (0) target = $region65
    $region64: #{_fused_forward_impl.1} parent=1 // pred_region
      _
    $region65: #{_fused_forward_impl.1} parent=1 // pred_fallthru
      _
    // Predicated region
    $region66: #{_fused_forward_impl.1} parent=1 // pred_check
      _
    $region67: #{_fused_forward_impl.1} parent=1 // pred_check_branch
      %2019 = sbr.rel (0) target = $region69
    $region68: #{_fused_forward_impl.1} parent=1 // pred_region
      _
    $region69: #{_fused_forward_impl.1} parent=1 // pred_fallthru
      _
    // Predicated region
    $region70: #{_fused_forward_impl.1} parent=1 // pred_check
      _
    $region71: #{_fused_forward_impl.1} parent=1 // pred_check_branch
      %2021 = sbr.rel (0) target = $region73
    $region72: #{_fused_forward_impl.1} parent=1 // pred_region
      _
    $region73: #{_fused_forward_impl.1} parent=1 // pred_fallthru
      _
    // Predicated region
    $region74: #{_fused_forward_impl.1} parent=1 // pred_check
      _
    $region75: #{_fused_forward_impl.1} parent=1 // pred_check_branch
      %2023 = sbr.rel (0) target = $region77
    $region76: #{_fused_forward_impl.1} parent=1 // pred_region
      _
    $region77: #{_fused_forward_impl.1} parent=1 // pred_fallthru
      _
    // Predicated region
    $region78: #{_fused_forward_impl.1} parent=1 // pred_check
      _
    $region79: #{_fused_forward_impl.1} parent=1 // pred_check_branch
      %2025 = sbr.rel (0) target = $region81
    $region80: #{_fused_forward_impl.1} parent=1 // pred_region
      _
    $region81: #{_fused_forward_impl.1} parent=1 // pred_fallthru
      _
    // Predicated region
    $region82: #{_fused_forward_impl.1} parent=1 // pred_check
      _
    $region83: #{_fused_forward_impl.1} parent=1 // pred_check_branch
      %2027 = sbr.rel (0) target = $region85
    $region84: #{_fused_forward_impl.1} parent=1 // pred_region
      _
    $region85: #{_fused_forward_impl.1} parent=1 // pred_fallthru
      _
    %2028 = vsyncpa [#allocation3], 1
    %2029 = vsyncpa [#allocation4], 1

</llo_original>
